<compile_context>
chip_gen: v5e
topology: v5e:2x2
jax: 0.10.0
libtpu: 0.0.40
codegen_flags: <defaults>
</compile_context>

<pallas_src>
import functools

import jax
import jax.numpy as jnp
from jax.experimental import pallas as pl
from jax.experimental.pallas import tpu as pltpu


def _cdiv(a, b):
    return -(-a // b)


def _round_up(a, m):
    return -(-a // m) * m


def xsscnn_kernel(xe_ref, xo_ref, w1_ref, b1_ref, w2_ref, b2_ref,
                  d1w_ref, d1b_ref, d2w_ref, d2b_ref, out_ref,
                  p1_s, y2_s, *, bt, s2, p2_len):
    # ---- conv1 (one lane-dense im2col matmul per pooling parity) fused with
    #      bias + ReLU + maxpool1:  p1 = relu(max(even, odd) + b1).
    #      Rows are position-major: row p*bt + i == pooled position p, sample i.
    ye = jnp.dot(xe_ref[...], w1_ref[...], preferred_element_type=jnp.float32)
    yo = jnp.dot(xo_ref[...], w1_ref[...], preferred_element_type=jnp.float32)
    p1_s[...] = jnp.maximum(jnp.maximum(ye, yo) + b1_ref[...], 0.0)
    # drop1: identity in eval/inference mode.

    # ---- conv2 (3 taps as tile-aligned block-shifted matmuls) + ReLU.
    #      Only the s2 = 2*P2 positions that feed valid pooled outputs are
    #      computed; shifts are multiples of bt, so every read is aligned.
    m2 = s2 * bt
    acc = jnp.dot(p1_s[pl.ds(0, m2), :], w2_ref[0],
                  preferred_element_type=jnp.float32)
    acc = acc + jnp.dot(p1_s[pl.ds(bt, m2), :], w2_ref[1],
                        preferred_element_type=jnp.float32)
    acc = acc + jnp.dot(p1_s[pl.ds(2 * bt, m2), :], w2_ref[2],
                        preferred_element_type=jnp.float32)
    y2_s[...] = jnp.maximum(acc + b2_ref[...], 0.0)
    # drop2: identity in eval/inference mode.

    # ---- maxpool2 fused with dense1: adjacent bt-row blocks (conv2 positions
    #      2q and 2q+1) are max-reduced and contracted against the per-position
    #      (32, 128) weight slab.  All reads are contiguous and tile-aligned.
    h = jnp.dot(jnp.maximum(y2_s[pl.ds(0, bt), :], y2_s[pl.ds(bt, bt), :]),
                d1w_ref[0], preferred_element_type=jnp.float32)
    for q in range(1, p2_len):
        mq = jnp.maximum(y2_s[pl.ds(2 * q * bt, bt), :],
                         y2_s[pl.ds((2 * q + 1) * bt, bt), :])
        h = h + jnp.dot(mq, d1w_ref[q], preferred_element_type=jnp.float32)
    h = h + d1b_ref[...]

    # ---- dense2 + softmax over the 2 classes ----
    logits = jnp.dot(h, d2w_ref[...],
                     preferred_element_type=jnp.float32) + d2b_ref[...]
    mx = jnp.max(logits, axis=1, keepdims=True)
    e = jnp.exp(logits - mx)
    out_ref[...] = e / jnp.sum(e, axis=1, keepdims=True)


def xsscnn_pallas(x_ncl, W1, b1, W2, b2, Wd1, bd1, Wd2, bd2, *, batch_tile=None):
    """x_ncl: (B, C_in, L) float32 -- same layout as the PyTorch module."""
    B, C_in, L = x_ncl.shape
    P1 = (L - 2) // 2            # maxpool1 output length
    P2 = (P1 - 2) // 2           # final_length
    S2 = 2 * P2                  # conv2 positions that feed valid pooled outputs
    C1, C2, H, NCLS = 64, 32, 100, 2
    K0 = _round_up(3 * C_in, 128)        # im2col K (96 -> 128 lanes)
    Hp = 128                             # hidden width padded 100 -> 128

    # ---- batch tile: big (256-512 class) tiles; even grid-step count when
    #      possible so v7x's 2 TensorCores both get work. ----
    if batch_tile is None:
        bt = min(512, max(8, _round_up(_cdiv(B, 2), 8)))
        n_tiles = _cdiv(B, bt)
        if n_tiles > 1 and n_tiles % 2 == 1:
            bt = max(8, _round_up(_cdiv(B, n_tiles + 1), 8))
            n_tiles = _cdiv(B, bt)
    else:
        bt = max(8, _round_up(batch_tile, 8))
        n_tiles = _cdiv(B, bt)
    B_pad = n_tiles * bt

    # ---- host-side layout plumbing (plain JAX / XLA glue) ----
    x_lc = jnp.transpose(x_ncl, (0, 2, 1)).astype(jnp.float32)   # (B, L, C)
    x_lc = jnp.pad(x_lc, ((0, B_pad - B), (0, 0), (0, 0)))
    p_idx = jnp.arange(P1)

    def parity_im2col(starts):
        # rows: [tile, pooled position p, sample i] -> taps at starts[p]+{0,1,2}
        taps = jnp.concatenate([x_lc[:, starts, :],
                                x_lc[:, starts + 1, :],
                                x_lc[:, starts + 2, :]], axis=-1)  # (B_pad,P1,3C)
        taps = jnp.pad(taps, ((0, 0), (0, 0), (0, K0 - 3 * C_in)))
        taps = taps.reshape(n_tiles, bt, P1, K0).transpose(0, 2, 1, 3)
        return taps.reshape(n_tiles * P1 * bt, K0)

    x_even = parity_im2col(2 * p_idx)        # conv1 positions 0, 2, 4, ...
    x_odd = parity_im2col(2 * p_idx + 1)     # conv1 positions 1, 3, 5, ...

    # conv1 weight as im2col (row k*C_in + c), padded to K0 rows.
    w1 = jnp.pad(jnp.transpose(W1, (2, 1, 0)).reshape(3 * C_in, C1),
                 ((0, K0 - 3 * C_in), (0, 0)))                    # (K0, 64)
    b1r = b1[None, :]                                             # (1, 64)
    w2 = jnp.transpose(W2, (2, 1, 0))                             # (3, 64, 32)
    b2r = b2[None, :]                                             # (1, 32)
    # dense1 weight: position-major (P2, 32, Hp); reproduces PyTorch's
    # channel-major flatten (flat @ Wd1.T) exactly.  Hidden padded to 128.
    d1w = jnp.pad(jnp.transpose(Wd1.reshape(H, C2, P2), (2, 1, 0)),
                  ((0, 0), (0, 0), (0, Hp - H)))                  # (P2, 32, Hp)
    d1b = jnp.pad(bd1, (0, Hp - H))[None, :]                      # (1, Hp)
    d2w = jnp.pad(Wd2.T, ((0, Hp - H), (0, 0)))                   # (Hp, 2)
    d2b = bd2[None, :]                                            # (1, 2)

    kernel = functools.partial(xsscnn_kernel, bt=bt, s2=S2, p2_len=P2)

    grid_spec = pltpu.PrefetchScalarGridSpec(
        num_scalar_prefetch=0,
        grid=(n_tiles,),
        in_specs=[
            pl.BlockSpec((P1 * bt, K0), lambda i: (i, 0)),   # x_even
            pl.BlockSpec((P1 * bt, K0), lambda i: (i, 0)),   # x_odd
            pl.BlockSpec((K0, C1), lambda i: (0, 0)),        # w1 (im2col)
            pl.BlockSpec((1, C1), lambda i: (0, 0)),         # b1
            pl.BlockSpec((3, C1, C2), lambda i: (0, 0, 0)),  # w2
            pl.BlockSpec((1, C2), lambda i: (0, 0)),         # b2
            pl.BlockSpec((P2, C2, Hp), lambda i: (0, 0, 0)),  # d1w
            pl.BlockSpec((1, Hp), lambda i: (0, 0)),         # d1b
            pl.BlockSpec((Hp, NCLS), lambda i: (0, 0)),      # d2w
            pl.BlockSpec((1, NCLS), lambda i: (0, 0)),       # d2b
        ],
        out_specs=pl.BlockSpec((bt, NCLS), lambda i: (i, 0)),
        scratch_shapes=[
            pltpu.VMEM((P1 * bt, C1), jnp.float32),   # p1 (pooled-1), pos-major
            pltpu.VMEM((S2 * bt, C2), jnp.float32),   # conv2 + ReLU output
        ],
    )

    flops_per_tile = (2 * 2 * (P1 * bt) * K0 * C1        # conv1 (both parities)
                      + 3 * 2 * (S2 * bt) * C1 * C2      # conv2
                      + P2 * 2 * bt * C2 * Hp            # dense1
                      + 2 * bt * Hp * NCLS)              # dense2
    param_bytes = 4 * (w1.size + b1r.size + w2.size + b2r.size
                       + d1w.size + d1b.size + d2w.size + d2b.size)
    cost = pl.CostEstimate(
        flops=int(n_tiles * flops_per_tile),
        transcendentals=int(B_pad * NCLS),
        bytes_accessed=int(4 * (2 * n_tiles * P1 * bt * K0 + B_pad * NCLS)
                           + param_bytes),
    )

    out = pl.pallas_call(
        kernel,
        out_shape=jax.ShapeDtypeStruct((B_pad, NCLS), jnp.float32),
        grid_spec=grid_spec,
        compiler_params=pltpu.CompilerParams(
            dimension_semantics=("parallel",),
            vmem_limit_bytes=48 * 1024 * 1024),
        cost_estimate=cost,
    )(x_even, x_odd, w1, b1r, w2, b2r, d1w, d1b, d2w, d2b)
    return out[:B]


def xsscnn_ref(x, W1, b1, W2, b2, Wd1, bd1, Wd2, bd2):
    """Plain-JAX reference with PyTorch semantics (eval mode)."""
    dn = ('NCH', 'OIH', 'NCH')
    y1 = jax.lax.conv_general_dilated(x, W1, (1,), 'VALID', dimension_numbers=dn)
    y1 = jax.nn.relu(y1 + b1[None, :, None])
    P1 = y1.shape[2] // 2
    y1 = y1[:, :, :2 * P1].reshape(y1.shape[0], y1.shape[1], P1, 2).max(-1)
    y2 = jax.lax.conv_general_dilated(y1, W2, (1,), 'VALID', dimension_numbers=dn)
    y2 = jax.nn.relu(y2 + b2[None, :, None])
    P2 = y2.shape[2] // 2
    y2 = y2[:, :, :2 * P2].reshape(y2.shape[0], y2.shape[1], P2, 2).max(-1)
    flat = y2.reshape(y2.shape[0], -1)
    h = flat @ Wd1.T + bd1
    logits = h @ Wd2.T + bd2
    return jax.nn.softmax(logits, axis=1)


if __name__ == "__main__":
    # Shapes consistent with the module: text_length=36, embedding_size=32.
    #   final_length = int((int((36-2)/2) - 2)/2) = 7  -> dense1 in = 32*7 = 224
    # B=12 is deliberately not a multiple of the batch tile to exercise padding
    # and to produce 2 "parallel" grid steps.
    B, C_IN, L = 12, 32, 36
    P2 = ((L - 2) // 2 - 2) // 2

    key = jax.random.PRNGKey(0)
    ks = jax.random.split(key, 9)
    x = jax.random.normal(ks[0], (B, C_IN, L), jnp.float32)

    # Deterministic synthetic parameters (PyTorch shapes).
    W1 = 0.1 * jax.random.normal(ks[1], (64, C_IN, 3), jnp.float32)   # conv1.weight
    b1 = 0.1 * jax.random.normal(ks[2], (64,), jnp.float32)           # conv1.bias
    W2 = 0.1 * jax.random.normal(ks[3], (32, 64, 3), jnp.float32)     # conv2.weight
    b2 = 0.1 * jax.random.normal(ks[4], (32,), jnp.float32)           # conv2.bias
    Wd1 = 0.1 * jax.random.normal(ks[5], (100, 32 * P2), jnp.float32) # dense1.weight
    bd1 = 0.1 * jax.random.normal(ks[6], (100,), jnp.float32)         # dense1.bias
    Wd2 = 0.1 * jax.random.normal(ks[7], (2, 100), jnp.float32)       # dense2.weight
    bd2 = 0.1 * jax.random.normal(ks[8], (2,), jnp.float32)           # dense2.bias

    out = xsscnn_pallas(x, W1, b1, W2, b2, Wd1, bd1, Wd2, bd2)
    out = jax.block_until_ready(out)

    ref = xsscnn_ref(x, W1, b1, W2, b2, Wd1, bd1, Wd2, bd2)
    assert out.shape == (B, 2)
    assert jnp.allclose(out, ref, rtol=1e-4, atol=1e-4), (out, ref)

    print("KERNEL_OK")
</pallas_src>

<mosaic_0001>
module attributes {stable_mosaic.version = 11 : i64} {
  func.func @xsscnn_kernel(%arg0: i32, %arg1: memref<136x128xf32, #tpu.memory_space<vmem>>, %arg2: memref<136x128xf32, #tpu.memory_space<vmem>>, %arg3: memref<128x64xf32, #tpu.memory_space<vmem>>, %arg4: memref<1x64xf32, #tpu.memory_space<vmem>>, %arg5: memref<3x64x32xf32, #tpu.memory_space<vmem>>, %arg6: memref<1x32xf32, #tpu.memory_space<vmem>>, %arg7: memref<7x32x128xf32, #tpu.memory_space<vmem>>, %arg8: memref<1x128xf32, #tpu.memory_space<vmem>>, %arg9: memref<128x2xf32, #tpu.memory_space<vmem>>, %arg10: memref<1x2xf32, #tpu.memory_space<vmem>>, %arg11: memref<8x2xf32, #tpu.memory_space<vmem>>, %arg12: memref<136x64xf32, #tpu.memory_space<vmem>>, %arg13: memref<112x32xf32, #tpu.memory_space<vmem>>) attributes {dimension_semantics = [#tpu.dimension_semantics<parallel>], iteration_bounds = array<i64: 2>, scalar_prefetch = 0 : i64, scratch_operands = 2 : i64, tpu.core_type = #tpu.core_type<tc>, window_params = [{transform_indices = @transform_0, window_bounds = array<i64: 136, 128>}, {transform_indices = @transform_1, window_bounds = array<i64: 136, 128>}, {pipeline_mode = #tpu.pipeline_mode<synchronous>, transform_indices = @transform_2, window_bounds = array<i64: 128, 64>}, {pipeline_mode = #tpu.pipeline_mode<synchronous>, transform_indices = @transform_3, window_bounds = array<i64: 1, 64>}, {pipeline_mode = #tpu.pipeline_mode<synchronous>, transform_indices = @transform_4, window_bounds = array<i64: 3, 64, 32>}, {pipeline_mode = #tpu.pipeline_mode<synchronous>, transform_indices = @transform_5, window_bounds = array<i64: 1, 32>}, {pipeline_mode = #tpu.pipeline_mode<synchronous>, transform_indices = @transform_6, window_bounds = array<i64: 7, 32, 128>}, {pipeline_mode = #tpu.pipeline_mode<synchronous>, transform_indices = @transform_7, window_bounds = array<i64: 1, 128>}, {pipeline_mode = #tpu.pipeline_mode<synchronous>, transform_indices = @transform_8, window_bounds = array<i64: 128, 2>}, {pipeline_mode = #tpu.pipeline_mode<synchronous>, transform_indices = @transform_9, window_bounds = array<i64: 1, 2>}, {transform_indices = @transform_10, window_bounds = array<i64: 8, 2>}]} {
    %c0 = arith.constant 0 : index
    %c0_0 = arith.constant 0 : index
    %0 = vector.load %arg1[%c0, %c0_0] : memref<136x128xf32, #tpu.memory_space<vmem>>, vector<136x128xf32>
    %c0_1 = arith.constant 0 : index
    %c0_2 = arith.constant 0 : index
    %1 = vector.load %arg3[%c0_1, %c0_2] : memref<128x64xf32, #tpu.memory_space<vmem>>, vector<128x64xf32>
    %cst = arith.constant dense<0.000000e+00> : vector<136x64xf32>
    %2 = tpu.matmul %0, %1, %cst {dimension_numbers = #tpu.dot_dimension_numbers<[1], [0], [0], [1], [0, 0, 1, 1], [], []>} : vector<136x128xf32>, vector<128x64xf32>, vector<136x64xf32> -> vector<136x64xf32>
    %c0_3 = arith.constant 0 : index
    %c0_4 = arith.constant 0 : index
    %3 = vector.load %arg2[%c0_3, %c0_4] : memref<136x128xf32, #tpu.memory_space<vmem>>, vector<136x128xf32>
    %c0_5 = arith.constant 0 : index
    %c0_6 = arith.constant 0 : index
    %4 = vector.load %arg3[%c0_5, %c0_6] : memref<128x64xf32, #tpu.memory_space<vmem>>, vector<128x64xf32>
    %cst_7 = arith.constant dense<0.000000e+00> : vector<136x64xf32>
    %5 = tpu.matmul %3, %4, %cst_7 {dimension_numbers = #tpu.dot_dimension_numbers<[1], [0], [0], [1], [0, 0, 1, 1], [], []>} : vector<136x128xf32>, vector<128x64xf32>, vector<136x64xf32> -> vector<136x64xf32>
    %6 = arith.maximumf %2, %5 : vector<136x64xf32>
    %c0_8 = arith.constant 0 : index
    %c0_9 = arith.constant 0 : index
    %7 = vector.load %arg4[%c0_8, %c0_9] : memref<1x64xf32, #tpu.memory_space<vmem>>, vector<1x64xf32>
    %8 = vector.broadcast %7 : vector<1x64xf32> to vector<136x64xf32>
    %9 = arith.addf %6, %8 : vector<136x64xf32>
    %cst_10 = arith.constant 0.000000e+00 : f32
    %10 = vector.broadcast %cst_10 : f32 to vector<136x64xf32>
    %11 = arith.maximumf %9, %10 : vector<136x64xf32>
    %c0_11 = arith.constant 0 : index
    %c0_12 = arith.constant 0 : index
    %12 = vector.load %arg12[%c0_11, %c0_12] : memref<136x64xf32, #tpu.memory_space<vmem>>, vector<136x64xf32>
    tpu.vector_store %arg12[%c0_11, %c0_12], %11 {strides = array<i32>} : memref<136x64xf32, #tpu.memory_space<vmem>>, vector<136x64xf32>,
    %c0_13 = arith.constant 0 : index
    %c0_14 = arith.constant 0 : index
    %13 = vector.load %arg12[%c0_13, %c0_14] : memref<136x64xf32, #tpu.memory_space<vmem>>, vector<112x64xf32>
    %c0_15 = arith.constant 0 : index
    %c0_16 = arith.constant 0 : index
    %c0_17 = arith.constant 0 : index
    %14 = vector.load %arg5[%c0_15, %c0_16, %c0_17] : memref<3x64x32xf32, #tpu.memory_space<vmem>>, vector<1x64x32xf32>
    %15 = vector.shape_cast %14 : vector<1x64x32xf32> to vector<64x32xf32>
    %cst_18 = arith.constant dense<0.000000e+00> : vector<112x32xf32>
    %16 = tpu.matmul %13, %15, %cst_18 {dimension_numbers = #tpu.dot_dimension_numbers<[1], [0], [0], [1], [0, 0, 1, 1], [], []>} : vector<112x64xf32>, vector<64x32xf32>, vector<112x32xf32> -> vector<112x32xf32>
    %c8 = arith.constant 8 : index
    %c0_19 = arith.constant 0 : index
    %17 = vector.load %arg12[%c8, %c0_19] : memref<136x64xf32, #tpu.memory_space<vmem>>, vector<112x64xf32>
    %c1 = arith.constant 1 : index
    %c0_20 = arith.constant 0 : index
    %c0_21 = arith.constant 0 : index
    %18 = vector.load %arg5[%c1, %c0_20, %c0_21] : memref<3x64x32xf32, #tpu.memory_space<vmem>>, vector<1x64x32xf32>
    %19 = vector.shape_cast %18 : vector<1x64x32xf32> to vector<64x32xf32>
    %cst_22 = arith.constant dense<0.000000e+00> : vector<112x32xf32>
    %20 = tpu.matmul %17, %19, %cst_22 {dimension_numbers = #tpu.dot_dimension_numbers<[1], [0], [0], [1], [0, 0, 1, 1], [], []>} : vector<112x64xf32>, vector<64x32xf32>, vector<112x32xf32> -> vector<112x32xf32>
    %21 = arith.addf %16, %20 : vector<112x32xf32>
    %c16 = arith.constant 16 : index
    %c0_23 = arith.constant 0 : index
    %22 = vector.load %arg12[%c16, %c0_23] : memref<136x64xf32, #tpu.memory_space<vmem>>, vector<112x64xf32>
    %c2 = arith.constant 2 : index
    %c0_24 = arith.constant 0 : index
    %c0_25 = arith.constant 0 : index
    %23 = vector.load %arg5[%c2, %c0_24, %c0_25] : memref<3x64x32xf32, #tpu.memory_space<vmem>>, vector<1x64x32xf32>
    %24 = vector.shape_cast %23 : vector<1x64x32xf32> to vector<64x32xf32>
    %cst_26 = arith.constant dense<0.000000e+00> : vector<112x32xf32>
    %25 = tpu.matmul %22, %24, %cst_26 {dimension_numbers = #tpu.dot_dimension_numbers<[1], [0], [0], [1], [0, 0, 1, 1], [], []>} : vector<112x64xf32>, vector<64x32xf32>, vector<112x32xf32> -> vector<112x32xf32>
    %26 = arith.addf %21, %25 : vector<112x32xf32>
    %c0_27 = arith.constant 0 : index
    %c0_28 = arith.constant 0 : index
    %27 = vector.load %arg6[%c0_27, %c0_28] : memref<1x32xf32, #tpu.memory_space<vmem>>, vector<1x32xf32>
    %28 = vector.broadcast %27 : vector<1x32xf32> to vector<112x32xf32>
    %29 = arith.addf %26, %28 : vector<112x32xf32>
    %cst_29 = arith.constant 0.000000e+00 : f32
    %30 = vector.broadcast %cst_29 : f32 to vector<112x32xf32>
    %31 = arith.maximumf %29, %30 : vector<112x32xf32>
    %c0_30 = arith.constant 0 : index
    %c0_31 = arith.constant 0 : index
    %32 = vector.load %arg13[%c0_30, %c0_31] : memref<112x32xf32, #tpu.memory_space<vmem>>, vector<112x32xf32>
    tpu.vector_store %arg13[%c0_30, %c0_31], %31 {strides = array<i32>} : memref<112x32xf32, #tpu.memory_space<vmem>>, vector<112x32xf32>,
    %c0_32 = arith.constant 0 : index
    %c0_33 = arith.constant 0 : index
    %33 = vector.load %arg13[%c0_32, %c0_33] : memref<112x32xf32, #tpu.memory_space<vmem>>, vector<8x32xf32>
    %c8_34 = arith.constant 8 : index
    %c0_35 = arith.constant 0 : index
    %34 = vector.load %arg13[%c8_34, %c0_35] : memref<112x32xf32, #tpu.memory_space<vmem>>, vector<8x32xf32>
    %35 = arith.maximumf %33, %34 : vector<8x32xf32>
    %c0_36 = arith.constant 0 : index
    %c0_37 = arith.constant 0 : index
    %c0_38 = arith.constant 0 : index
    %36 = vector.load %arg7[%c0_36, %c0_37, %c0_38] : memref<7x32x128xf32, #tpu.memory_space<vmem>>, vector<1x32x128xf32>
    %37 = vector.shape_cast %36 : vector<1x32x128xf32> to vector<32x128xf32>
    %cst_39 = arith.constant dense<0.000000e+00> : vector<8x128xf32>
    %38 = tpu.matmul %35, %37, %cst_39 {dimension_numbers = #tpu.dot_dimension_numbers<[1], [0], [0], [1], [0, 0, 1, 1], [], []>} : vector<8x32xf32>, vector<32x128xf32>, vector<8x128xf32> -> vector<8x128xf32>
    %c16_40 = arith.constant 16 : index
    %c0_41 = arith.constant 0 : index
    %39 = vector.load %arg13[%c16_40, %c0_41] : memref<112x32xf32, #tpu.memory_space<vmem>>, vector<8x32xf32>
    %c24 = arith.constant 24 : index
    %c0_42 = arith.constant 0 : index
    %40 = vector.load %arg13[%c24, %c0_42] : memref<112x32xf32, #tpu.memory_space<vmem>>, vector<8x32xf32>
    %41 = arith.maximumf %39, %40 : vector<8x32xf32>
    %c1_43 = arith.constant 1 : index
    %c0_44 = arith.constant 0 : index
    %c0_45 = arith.constant 0 : index
    %42 = vector.load %arg7[%c1_43, %c0_44, %c0_45] : memref<7x32x128xf32, #tpu.memory_space<vmem>>, vector<1x32x128xf32>
    %43 = vector.shape_cast %42 : vector<1x32x128xf32> to vector<32x128xf32>
    %cst_46 = arith.constant dense<0.000000e+00> : vector<8x128xf32>
    %44 = tpu.matmul %41, %43, %cst_46 {dimension_numbers = #tpu.dot_dimension_numbers<[1], [0], [0], [1], [0, 0, 1, 1], [], []>} : vector<8x32xf32>, vector<32x128xf32>, vector<8x128xf32> -> vector<8x128xf32>
    %45 = arith.addf %38, %44 : vector<8x128xf32>
    %c32 = arith.constant 32 : index
    %c0_47 = arith.constant 0 : index
    %46 = vector.load %arg13[%c32, %c0_47] : memref<112x32xf32, #tpu.memory_space<vmem>>, vector<8x32xf32>
    %c40 = arith.constant 40 : index
    %c0_48 = arith.constant 0 : index
    %47 = vector.load %arg13[%c40, %c0_48] : memref<112x32xf32, #tpu.memory_space<vmem>>, vector<8x32xf32>
    %48 = arith.maximumf %46, %47 : vector<8x32xf32>
    %c2_49 = arith.constant 2 : index
    %c0_50 = arith.constant 0 : index
    %c0_51 = arith.constant 0 : index
    %49 = vector.load %arg7[%c2_49, %c0_50, %c0_51] : memref<7x32x128xf32, #tpu.memory_space<vmem>>, vector<1x32x128xf32>
    %50 = vector.shape_cast %49 : vector<1x32x128xf32> to vector<32x128xf32>
    %cst_52 = arith.constant dense<0.000000e+00> : vector<8x128xf32>
    %51 = tpu.matmul %48, %50, %cst_52 {dimension_numbers = #tpu.dot_dimension_numbers<[1], [0], [0], [1], [0, 0, 1, 1], [], []>} : vector<8x32xf32>, vector<32x128xf32>, vector<8x128xf32> -> vector<8x128xf32>
    %52 = arith.addf %45, %51 : vector<8x128xf32>
    %c48 = arith.constant 48 : index
    %c0_53 = arith.constant 0 : index
    %53 = vector.load %arg13[%c48, %c0_53] : memref<112x32xf32, #tpu.memory_space<vmem>>, vector<8x32xf32>
    %c56 = arith.constant 56 : index
    %c0_54 = arith.constant 0 : index
    %54 = vector.load %arg13[%c56, %c0_54] : memref<112x32xf32, #tpu.memory_space<vmem>>, vector<8x32xf32>
    %55 = arith.maximumf %53, %54 : vector<8x32xf32>
    %c3 = arith.constant 3 : index
    %c0_55 = arith.constant 0 : index
    %c0_56 = arith.constant 0 : index
    %56 = vector.load %arg7[%c3, %c0_55, %c0_56] : memref<7x32x128xf32, #tpu.memory_space<vmem>>, vector<1x32x128xf32>
    %57 = vector.shape_cast %56 : vector<1x32x128xf32> to vector<32x128xf32>
    %cst_57 = arith.constant dense<0.000000e+00> : vector<8x128xf32>
    %58 = tpu.matmul %55, %57, %cst_57 {dimension_numbers = #tpu.dot_dimension_numbers<[1], [0], [0], [1], [0, 0, 1, 1], [], []>} : vector<8x32xf32>, vector<32x128xf32>, vector<8x128xf32> -> vector<8x128xf32>
    %59 = arith.addf %52, %58 : vector<8x128xf32>
    %c64 = arith.constant 64 : index
    %c0_58 = arith.constant 0 : index
    %60 = vector.load %arg13[%c64, %c0_58] : memref<112x32xf32, #tpu.memory_space<vmem>>, vector<8x32xf32>
    %c72 = arith.constant 72 : index
    %c0_59 = arith.constant 0 : index
    %61 = vector.load %arg13[%c72, %c0_59] : memref<112x32xf32, #tpu.memory_space<vmem>>, vector<8x32xf32>
    %62 = arith.maximumf %60, %61 : vector<8x32xf32>
    %c4 = arith.constant 4 : index
    %c0_60 = arith.constant 0 : index
    %c0_61 = arith.constant 0 : index
    %63 = vector.load %arg7[%c4, %c0_60, %c0_61] : memref<7x32x128xf32, #tpu.memory_space<vmem>>, vector<1x32x128xf32>
    %64 = vector.shape_cast %63 : vector<1x32x128xf32> to vector<32x128xf32>
    %cst_62 = arith.constant dense<0.000000e+00> : vector<8x128xf32>
    %65 = tpu.matmul %62, %64, %cst_62 {dimension_numbers = #tpu.dot_dimension_numbers<[1], [0], [0], [1], [0, 0, 1, 1], [], []>} : vector<8x32xf32>, vector<32x128xf32>, vector<8x128xf32> -> vector<8x128xf32>
    %66 = arith.addf %59, %65 : vector<8x128xf32>
    %c80 = arith.constant 80 : index
    %c0_63 = arith.constant 0 : index
    %67 = vector.load %arg13[%c80, %c0_63] : memref<112x32xf32, #tpu.memory_space<vmem>>, vector<8x32xf32>
    %c88 = arith.constant 88 : index
    %c0_64 = arith.constant 0 : index
    %68 = vector.load %arg13[%c88, %c0_64] : memref<112x32xf32, #tpu.memory_space<vmem>>, vector<8x32xf32>
    %69 = arith.maximumf %67, %68 : vector<8x32xf32>
    %c5 = arith.constant 5 : index
    %c0_65 = arith.constant 0 : index
    %c0_66 = arith.constant 0 : index
    %70 = vector.load %arg7[%c5, %c0_65, %c0_66] : memref<7x32x128xf32, #tpu.memory_space<vmem>>, vector<1x32x128xf32>
    %71 = vector.shape_cast %70 : vector<1x32x128xf32> to vector<32x128xf32>
    %cst_67 = arith.constant dense<0.000000e+00> : vector<8x128xf32>
    %72 = tpu.matmul %69, %71, %cst_67 {dimension_numbers = #tpu.dot_dimension_numbers<[1], [0], [0], [1], [0, 0, 1, 1], [], []>} : vector<8x32xf32>, vector<32x128xf32>, vector<8x128xf32> -> vector<8x128xf32>
    %73 = arith.addf %66, %72 : vector<8x128xf32>
    %c96 = arith.constant 96 : index
    %c0_68 = arith.constant 0 : index
    %74 = vector.load %arg13[%c96, %c0_68] : memref<112x32xf32, #tpu.memory_space<vmem>>, vector<8x32xf32>
    %c104 = arith.constant 104 : index
    %c0_69 = arith.constant 0 : index
    %75 = vector.load %arg13[%c104, %c0_69] : memref<112x32xf32, #tpu.memory_space<vmem>>, vector<8x32xf32>
    %76 = arith.maximumf %74, %75 : vector<8x32xf32>
    %c6 = arith.constant 6 : index
    %c0_70 = arith.constant 0 : index
    %c0_71 = arith.constant 0 : index
    %77 = vector.load %arg7[%c6, %c0_70, %c0_71] : memref<7x32x128xf32, #tpu.memory_space<vmem>>, vector<1x32x128xf32>
    %78 = vector.shape_cast %77 : vector<1x32x128xf32> to vector<32x128xf32>
    %cst_72 = arith.constant dense<0.000000e+00> : vector<8x128xf32>
    %79 = tpu.matmul %76, %78, %cst_72 {dimension_numbers = #tpu.dot_dimension_numbers<[1], [0], [0], [1], [0, 0, 1, 1], [], []>} : vector<8x32xf32>, vector<32x128xf32>, vector<8x128xf32> -> vector<8x128xf32>
    %80 = arith.addf %73, %79 : vector<8x128xf32>
    %c0_73 = arith.constant 0 : index
    %c0_74 = arith.constant 0 : index
    %81 = vector.load %arg8[%c0_73, %c0_74] : memref<1x128xf32, #tpu.memory_space<vmem>>, vector<1x128xf32>
    %82 = vector.broadcast %81 : vector<1x128xf32> to vector<8x128xf32>
    %83 = arith.addf %80, %82 : vector<8x128xf32>
    %c0_75 = arith.constant 0 : index
    %c0_76 = arith.constant 0 : index
    %84 = vector.load %arg9[%c0_75, %c0_76] : memref<128x2xf32, #tpu.memory_space<vmem>>, vector<128x2xf32>
    %cst_77 = arith.constant dense<0.000000e+00> : vector<8x2xf32>
    %85 = tpu.matmul %83, %84, %cst_77 {dimension_numbers = #tpu.dot_dimension_numbers<[1], [0], [0], [1], [0, 0, 1, 1], [], []>} : vector<8x128xf32>, vector<128x2xf32>, vector<8x2xf32> -> vector<8x2xf32>
    %c0_78 = arith.constant 0 : index
    %c0_79 = arith.constant 0 : index
    %86 = vector.load %arg10[%c0_78, %c0_79] : memref<1x2xf32, #tpu.memory_space<vmem>>, vector<1x2xf32>
    %87 = vector.broadcast %86 : vector<1x2xf32> to vector<8x2xf32>
    %88 = arith.addf %85, %87 : vector<8x2xf32>
    %cst_80 = arith.constant dense<0xFF800000> : vector<8xf32>
    %89 = vector.multi_reduction <maximumf>, %88, %cst_80 [1] : vector<8x2xf32> to vector<8xf32>
    %90 = vector.shape_cast %89 : vector<8xf32> to vector<8x1xf32>
    %91 = vector.broadcast %90 : vector<8x1xf32> to vector<8x2xf32>
    %92 = arith.subf %88, %91 : vector<8x2xf32>
    %93 = math.exp %92 : vector<8x2xf32>
    %cst_81 = arith.constant dense<0.000000e+00> : vector<8xf32>
    %94 = vector.multi_reduction <add>, %93, %cst_81 [1] : vector<8x2xf32> to vector<8xf32>
    %95 = vector.shape_cast %94 : vector<8xf32> to vector<8x1xf32>
    %96 = vector.broadcast %95 : vector<8x1xf32> to vector<8x2xf32>
    %97 = arith.divf %93, %96 : vector<8x2xf32>
    %c0_82 = arith.constant 0 : index
    %c0_83 = arith.constant 0 : index
    %98 = vector.load %arg11[%c0_82, %c0_83] : memref<8x2xf32, #tpu.memory_space<vmem>>, vector<8x2xf32>
    tpu.vector_store %arg11[%c0_82, %c0_83], %97 {strides = array<i32>} : memref<8x2xf32, #tpu.memory_space<vmem>>, vector<8x2xf32>,
    return
  }
  func.func @transform_0(%arg0: i32) -> (i32, i32) {
    %c0_i32 = arith.constant 0 : i32
    %c0_i32_0 = arith.constant 0 : i32
    return %arg0, %c0_i32 : i32, i32
  }
  func.func @transform_1(%arg0: i32) -> (i32, i32) {
    %c0_i32 = arith.constant 0 : i32
    %c0_i32_0 = arith.constant 0 : i32
    return %arg0, %c0_i32 : i32, i32
  }
  func.func @transform_2(%arg0: i32) -> (i32, i32) {
    %c0_i32 = arith.constant 0 : i32
    %c0_i32_0 = arith.constant 0 : i32
    %c0_i32_1 = arith.constant 0 : i32
    return %c0_i32, %c0_i32_0 : i32, i32
  }
  func.func @transform_3(%arg0: i32) -> (i32, i32) {
    %c0_i32 = arith.constant 0 : i32
    %c0_i32_0 = arith.constant 0 : i32
    %c0_i32_1 = arith.constant 0 : i32
    return %c0_i32, %c0_i32_0 : i32, i32
  }
  func.func @transform_4(%arg0: i32) -> (i32, i32, i32) {
    %c0_i32 = arith.constant 0 : i32
    %c0_i32_0 = arith.constant 0 : i32
    %c0_i32_1 = arith.constant 0 : i32
    %c0_i32_2 = arith.constant 0 : i32
    return %c0_i32, %c0_i32_0, %c0_i32_1 : i32, i32, i32
  }
  func.func @transform_5(%arg0: i32) -> (i32, i32) {
    %c0_i32 = arith.constant 0 : i32
    %c0_i32_0 = arith.constant 0 : i32
    %c0_i32_1 = arith.constant 0 : i32
    return %c0_i32, %c0_i32_0 : i32, i32
  }
  func.func @transform_6(%arg0: i32) -> (i32, i32, i32) {
    %c0_i32 = arith.constant 0 : i32
    %c0_i32_0 = arith.constant 0 : i32
    %c0_i32_1 = arith.constant 0 : i32
    %c0_i32_2 = arith.constant 0 : i32
    return %c0_i32, %c0_i32_0, %c0_i32_1 : i32, i32, i32
  }
  func.func @transform_7(%arg0: i32) -> (i32, i32) {
    %c0_i32 = arith.constant 0 : i32
    %c0_i32_0 = arith.constant 0 : i32
    %c0_i32_1 = arith.constant 0 : i32
    return %c0_i32, %c0_i32_0 : i32, i32
  }
  func.func @transform_8(%arg0: i32) -> (i32, i32) {
    %c0_i32 = arith.constant 0 : i32
    %c0_i32_0 = arith.constant 0 : i32
    %c0_i32_1 = arith.constant 0 : i32
    return %c0_i32, %c0_i32_0 : i32, i32
  }
  func.func @transform_9(%arg0: i32) -> (i32, i32) {
    %c0_i32 = arith.constant 0 : i32
    %c0_i32_0 = arith.constant 0 : i32
    %c0_i32_1 = arith.constant 0 : i32
    return %c0_i32, %c0_i32_0 : i32, i32
  }
  func.func @transform_10(%arg0: i32) -> (i32, i32) {
    %c0_i32 = arith.constant 0 : i32
    %c0_i32_0 = arith.constant 0 : i32
    return %arg0, %c0_i32 : i32, i32
  }
}

</mosaic_0001>

<llo_original>
// kernel: tpu_custom_call.1
$region0: #{tpu_custom_call.1}
  #allocation0 [shape = 'u32[]', space=smem, size = 0x4, offset = 0x4, fixed_abs, tag = 'smem constant byte address 0x4 - core index']
  #allocation1 [shape = 'u32[72,128]{1,0:T(1,128)}', space=vmem, size = 0x9000, scoped, tag = 'internal scratch']
  #allocation2 [shape = 'f32[136,64]{1,0:T(8,128)}', space=vmem, size = 0x11000, scoped, tag = 'scratch operand']
  #allocation3 [shape = 'f32[112,32]{1,0:T(8,128)}', space=vmem, size = 0xe000, scoped, tag = 'scratch operand']
  %s0 = inlined_call_operand.vmem [shape: f32[272,128], index: 0, kind: input, shape index: {}]
  %s1 = inlined_call_operand.vmem [shape: f32[272,128], index: 1, kind: input, shape index: {}]
  %s2 = inlined_call_operand.vmem [shape: f32[128,64], index: 2, kind: input, shape index: {}]
  %s3 = inlined_call_operand.vmem [shape: f32[1,64], index: 3, kind: input, shape index: {}]
  %s4 = inlined_call_operand.vmem [shape: f32[3,64,32], index: 4, kind: input, shape index: {}]
  %s5 = inlined_call_operand.vmem [shape: f32[1,32], index: 5, kind: input, shape index: {}]
  %s6 = inlined_call_operand.hbm [shape: f32[7,32,128], index: 6, kind: input, shape index: {}]
  %s7 = inlined_call_operand.vmem [shape: f32[1,128], index: 7, kind: input, shape index: {}]
  %s8 = inlined_call_operand.vmem [shape: f32[128,2], index: 8, kind: input, shape index: {}]
  %s9 = inlined_call_operand.vmem [shape: f32[1,2], index: 9, kind: input, shape index: {}]
  %s10 = inlined_call_operand.vmem [shape: f32[16,2], index: 10, kind: output, shape index: {}]
  %s11 = sld [smem:[#allocation0]]
  $region77: #{tpu_custom_call.1} parent=0
    _
  %s13 = ssub.s32 1, %s11
  %s14 = scalar_select 0, %s13, %s11
  $region1: #{tpu_custom_call.1} parent=0
    #allocation4 [shape = 'u8[114688]{0}', space=vmem, size = 0x1c000, scoped, tag = 'input window, operand 6, single buffered']
    #allocation5 [shape = 's32[2]{0}', space=sflag, size = 0x8, scoped, tag = 'scoped memory for tpu_custom_call.1']
    %15 = vsyncpa [#allocation5], 0
    loop: start=0, step=1, limit=4
    $region2: #{tpu_custom_call.1} parent=1 // loop_pre_header
      _
    $region3: #{tpu_custom_call.1} parent=1 // loop_header
      %s17 = sphi 0, %s21
      %p18 = scmp.ge.s32.totalorder %s17, 4
      %s27 = sphi 0, %s29
      %s30 = sphi 0, %s27
      %s31 = sphi 0, %s30
      %s47 = sphi 0, %s31
      %s53 = sphi 0, %s55
      %s56 = sphi 0, %s53
      %s57 = sphi 0, %s56
      %s73 = sphi 0, %s57
      %s77 = sphi 0, %s77
      %s79 = sphi 0, %s77
      %s80 = sphi 0, %s79
      %s94 = sphi 0, %s80
      %s98 = sphi 0, %s98
      %s100 = sphi 0, %s98
      %s101 = sphi 0, %s100
      %s115 = sphi 0, %s101
      %s119 = sphi 0, %s119
      %s121 = sphi 0, %s119
      %s122 = sphi 0, %s121
      %s136 = sphi 0, %s122
      %s140 = sphi 0, %s140
      %s142 = sphi 0, %s140
      %s143 = sphi 0, %s142
      %s157 = sphi 0, %s143
      %s161 = sphi 0, %s161
      %s163 = sphi 0, %s161
      %s164 = sphi 0, %s163
      %s178 = sphi 0, %s164
      %s182 = sphi 0, %s182
      %s184 = sphi 0, %s182
      %s185 = sphi 0, %s184
      %s199 = sphi 0, %s185
      %s203 = sphi 0, %s203
      %s205 = sphi 0, %s203
      %s206 = sphi 0, %s205
      %s220 = sphi 0, %s206
      %s224 = sphi 0, %s224
      %s226 = sphi 0, %s224
      %s227 = sphi 0, %s226
      %s241 = sphi 0, %s227
      %s247 = sphi 0, %s249
      %s250 = sphi 0, %s247
      %s251 = sphi 0, %s250
      %s267 = sphi 0, %s251
    $region4: #{tpu_custom_call.1} parent=1 // loop_header_branch
      %20 = sbr.rel (%p18) target = $region8
    $region5: #{tpu_custom_call.1} parent=1 // loop_body
      %s22 = ssub.s32 %s17, 1
      %s23 = ssub.s32 %s17, 2
      %s24 = sadd.s32 %s17, 1
      %s25 = ssub.s32 %s17, %s24
      %p26 = scmp.eq.s32.totalorder %s25, 0
      %s28 = sadd.s32 %s27, 1
      %s29 = scalar_select %p26, %s27, %s28
      %p32 = pneg %p26
      %p33 = scmp.eq.s32.totalorder %s17, 1
      %p34 = por %p32, %p33
      %p35 = scmp.ne.s32.totalorder %s27, %s30
      %p36 = scmp.eq.s32.totalorder %s17, 0
      %p37 = por %p35, %p36
      %p38 = scmp.ne.s32.totalorder %s27, %s30
      %p39 = scmp.eq.s32.totalorder %s22, 1
      %p40 = por %p38, %p39
      %p41 = scmp.ne.s32.totalorder %s30, %s31
      %p42 = scmp.eq.s32.totalorder %s22, 0
      %p43 = por %p41, %p42
      %p44 = scmp.ne.s32.totalorder %s30, %s31
      %p45 = scmp.eq.s32.totalorder %s23, 1
      %p46 = por %p44, %p45
      %p48 = scmp.ne.s32.totalorder %s31, %s47
      %p49 = scmp.eq.s32.totalorder %s23, 0
      %p50 = por %p48, %p49
      %s51 = ssub.s32 %s17, %s24
      %p52 = scmp.eq.s32.totalorder %s51, 0
      %s54 = sadd.s32 %s53, 1
      %s55 = scalar_select %p52, %s53, %s54
      %p58 = pneg %p52
      %p59 = scmp.eq.s32.totalorder %s17, 1
      %p60 = por %p58, %p59
      %p61 = scmp.ne.s32.totalorder %s53, %s56
      %p62 = scmp.eq.s32.totalorder %s17, 0
      %p63 = por %p61, %p62
      %p64 = scmp.ne.s32.totalorder %s53, %s56
      %p65 = scmp.eq.s32.totalorder %s22, 1
      %p66 = por %p64, %p65
      %p67 = scmp.ne.s32.totalorder %s56, %s57
      %p68 = scmp.eq.s32.totalorder %s22, 0
      %p69 = por %p67, %p68
      %p70 = scmp.ne.s32.totalorder %s56, %s57
      %p71 = scmp.eq.s32.totalorder %s23, 1
      %p72 = por %p70, %p71
      %p74 = scmp.ne.s32.totalorder %s57, %s73
      %p75 = scmp.eq.s32.totalorder %s23, 0
      %p76 = por %p74, %p75
      %s78 = sadd.s32 %s77, 1
      %p81 = scmp.eq.s32.totalorder %s17, 1
      %p82 = scmp.ne.s32.totalorder %s77, %s79
      %p83 = scmp.eq.s32.totalorder %s17, 0
      %p84 = por %p82, %p83
      %p85 = scmp.ne.s32.totalorder %s77, %s79
      %p86 = scmp.eq.s32.totalorder %s22, 1
      %p87 = por %p85, %p86
      %p88 = scmp.ne.s32.totalorder %s79, %s80
      %p89 = scmp.eq.s32.totalorder %s22, 0
      %p90 = por %p88, %p89
      %p91 = scmp.ne.s32.totalorder %s79, %s80
      %p92 = scmp.eq.s32.totalorder %s23, 1
      %p93 = por %p91, %p92
      %p95 = scmp.ne.s32.totalorder %s80, %s94
      %p96 = scmp.eq.s32.totalorder %s23, 0
      %p97 = por %p95, %p96
      %s99 = sadd.s32 %s98, 1
      %p102 = scmp.eq.s32.totalorder %s17, 1
      %p103 = scmp.ne.s32.totalorder %s98, %s100
      %p104 = scmp.eq.s32.totalorder %s17, 0
      %p105 = por %p103, %p104
      %p106 = scmp.ne.s32.totalorder %s98, %s100
      %p107 = scmp.eq.s32.totalorder %s22, 1
      %p108 = por %p106, %p107
      %p109 = scmp.ne.s32.totalorder %s100, %s101
      %p110 = scmp.eq.s32.totalorder %s22, 0
      %p111 = por %p109, %p110
      %p112 = scmp.ne.s32.totalorder %s100, %s101
      %p113 = scmp.eq.s32.totalorder %s23, 1
      %p114 = por %p112, %p113
      %p116 = scmp.ne.s32.totalorder %s101, %s115
      %p117 = scmp.eq.s32.totalorder %s23, 0
      %p118 = por %p116, %p117
      %s120 = sadd.s32 %s119, 1
      %p123 = scmp.eq.s32.totalorder %s17, 1
      %p124 = scmp.ne.s32.totalorder %s119, %s121
      %p125 = scmp.eq.s32.totalorder %s17, 0
      %p126 = por %p124, %p125
      %p127 = scmp.ne.s32.totalorder %s119, %s121
      %p128 = scmp.eq.s32.totalorder %s22, 1
      %p129 = por %p127, %p128
      %p130 = scmp.ne.s32.totalorder %s121, %s122
      %p131 = scmp.eq.s32.totalorder %s22, 0
      %p132 = por %p130, %p131
      %p133 = scmp.ne.s32.totalorder %s121, %s122
      %p134 = scmp.eq.s32.totalorder %s23, 1
      %p135 = por %p133, %p134
      %p137 = scmp.ne.s32.totalorder %s122, %s136
      %p138 = scmp.eq.s32.totalorder %s23, 0
      %p139 = por %p137, %p138
      %s141 = sadd.s32 %s140, 1
      %p144 = scmp.eq.s32.totalorder %s17, 1
      %p145 = scmp.ne.s32.totalorder %s140, %s142
      %p146 = scmp.eq.s32.totalorder %s17, 0
      %p147 = por %p145, %p146
      %p148 = scmp.ne.s32.totalorder %s140, %s142
      %p149 = scmp.eq.s32.totalorder %s22, 1
      %p150 = por %p148, %p149
      %p151 = scmp.ne.s32.totalorder %s142, %s143
      %p152 = scmp.eq.s32.totalorder %s22, 0
      %p153 = por %p151, %p152
      %p154 = scmp.ne.s32.totalorder %s142, %s143
      %p155 = scmp.eq.s32.totalorder %s23, 1
      %p156 = por %p154, %p155
      %p158 = scmp.ne.s32.totalorder %s143, %s157
      %p159 = scmp.eq.s32.totalorder %s23, 0
      %p160 = por %p158, %p159
      %s162 = sadd.s32 %s161, 1
      %p165 = scmp.eq.s32.totalorder %s17, 1
      %p166 = scmp.ne.s32.totalorder %s161, %s163
      %p167 = scmp.eq.s32.totalorder %s17, 0
      %p168 = por %p166, %p167
      %p169 = scmp.ne.s32.totalorder %s161, %s163
      %p170 = scmp.eq.s32.totalorder %s22, 1
      %p171 = por %p169, %p170
      %p172 = scmp.ne.s32.totalorder %s163, %s164
      %p173 = scmp.eq.s32.totalorder %s22, 0
      %p174 = por %p172, %p173
      %p175 = scmp.ne.s32.totalorder %s163, %s164
      %p176 = scmp.eq.s32.totalorder %s23, 1
      %p177 = por %p175, %p176
      %p179 = scmp.ne.s32.totalorder %s164, %s178
      %p180 = scmp.eq.s32.totalorder %s23, 0
      %p181 = por %p179, %p180
      %s183 = sadd.s32 %s182, 1
      %p186 = scmp.eq.s32.totalorder %s17, 1
      %p187 = scmp.ne.s32.totalorder %s182, %s184
      %p188 = scmp.eq.s32.totalorder %s17, 0
      %p189 = por %p187, %p188
      %p190 = scmp.ne.s32.totalorder %s182, %s184
      %p191 = scmp.eq.s32.totalorder %s22, 1
      %p192 = por %p190, %p191
      %p193 = scmp.ne.s32.totalorder %s184, %s185
      %p194 = scmp.eq.s32.totalorder %s22, 0
      %p195 = por %p193, %p194
      %p196 = scmp.ne.s32.totalorder %s184, %s185
      %p197 = scmp.eq.s32.totalorder %s23, 1
      %p198 = por %p196, %p197
      %p200 = scmp.ne.s32.totalorder %s185, %s199
      %p201 = scmp.eq.s32.totalorder %s23, 0
      %p202 = por %p200, %p201
      %s204 = sadd.s32 %s203, 1
      %p207 = scmp.eq.s32.totalorder %s17, 1
      %p208 = scmp.ne.s32.totalorder %s203, %s205
      %p209 = scmp.eq.s32.totalorder %s17, 0
      %p210 = por %p208, %p209
      %p211 = scmp.ne.s32.totalorder %s203, %s205
      %p212 = scmp.eq.s32.totalorder %s22, 1
      %p213 = por %p211, %p212
      %p214 = scmp.ne.s32.totalorder %s205, %s206
      %p215 = scmp.eq.s32.totalorder %s22, 0
      %p216 = por %p214, %p215
      %p217 = scmp.ne.s32.totalorder %s205, %s206
      %p218 = scmp.eq.s32.totalorder %s23, 1
      %p219 = por %p217, %p218
      %p221 = scmp.ne.s32.totalorder %s206, %s220
      %p222 = scmp.eq.s32.totalorder %s23, 0
      %p223 = por %p221, %p222
      %s225 = sadd.s32 %s224, 1
      %p228 = scmp.eq.s32.totalorder %s17, 1
      %p229 = scmp.ne.s32.totalorder %s224, %s226
      %p230 = scmp.eq.s32.totalorder %s17, 0
      %p231 = por %p229, %p230
      %p232 = scmp.ne.s32.totalorder %s224, %s226
      %p233 = scmp.eq.s32.totalorder %s22, 1
      %p234 = por %p232, %p233
      %p235 = scmp.ne.s32.totalorder %s226, %s227
      %p236 = scmp.eq.s32.totalorder %s22, 0
      %p237 = por %p235, %p236
      %p238 = scmp.ne.s32.totalorder %s226, %s227
      %p239 = scmp.eq.s32.totalorder %s23, 1
      %p240 = por %p238, %p239
      %p242 = scmp.ne.s32.totalorder %s227, %s241
      %p243 = scmp.eq.s32.totalorder %s23, 0
      %p244 = por %p242, %p243
      %s245 = ssub.s32 %s17, %s24
      %p246 = scmp.eq.s32.totalorder %s245, 0
      %s248 = sadd.s32 %s247, 1
      %s249 = scalar_select %p246, %s247, %s248
      %p252 = pneg %p246
      %p253 = scmp.eq.s32.totalorder %s17, 1
      %p254 = por %p252, %p253
      %p255 = scmp.ne.s32.totalorder %s247, %s250
      %p256 = scmp.eq.s32.totalorder %s17, 0
      %p257 = por %p255, %p256
      %p258 = scmp.ne.s32.totalorder %s247, %s250
      %p259 = scmp.eq.s32.totalorder %s22, 1
      %p260 = por %p258, %p259
      %p261 = scmp.ne.s32.totalorder %s250, %s251
      %p262 = scmp.eq.s32.totalorder %s22, 0
      %p263 = por %p261, %p262
      %p264 = scmp.ne.s32.totalorder %s250, %s251
      %p265 = scmp.eq.s32.totalorder %s23, 1
      %p266 = por %p264, %p265
      %p268 = scmp.ne.s32.totalorder %s251, %s267
      %p269 = scmp.eq.s32.totalorder %s23, 0
      %p270 = por %p268, %p269
      %p271 = scmp.le.s32.totalorder 1, %s17
      %p272 = scmp.lt.s32.totalorder %s17, 3
      %p273 = pnand %p271, %p272
      %p274 = pneg %p273
      // Predicated region
      $region9: #{tpu_custom_call.1} parent=5 // pred_check
        _
      $region10: #{tpu_custom_call.1} parent=5 // pred_check_branch
        %276 = sbr.rel (%p273) target = $region12
      $region11: #{tpu_custom_call.1} parent=5 // pred_region
        %s277 = ssub.s32 %s17, 1
        // Predicated region
        $region13: #{tpu_custom_call.1} parent=11 // pred_check
          %p278 = pneg %p90
        $region14: #{tpu_custom_call.1} parent=11 // pred_check_branch
          %280 = sbr.rel (%p278) target = $region16
        $region15: #{tpu_custom_call.1} parent=11 // pred_region
          _
        $region16: #{tpu_custom_call.1} parent=11 // pred_fallthru
          _
        // Predicated region
        $region17: #{tpu_custom_call.1} parent=11 // pred_check
          %p281 = pneg %p111
        $region18: #{tpu_custom_call.1} parent=11 // pred_check_branch
          %283 = sbr.rel (%p281) target = $region20
        $region19: #{tpu_custom_call.1} parent=11 // pred_region
          _
        $region20: #{tpu_custom_call.1} parent=11 // pred_fallthru
          _
        // Predicated region
        $region21: #{tpu_custom_call.1} parent=11 // pred_check
          %p284 = pneg %p132
        $region22: #{tpu_custom_call.1} parent=11 // pred_check_branch
          %286 = sbr.rel (%p284) target = $region24
        $region23: #{tpu_custom_call.1} parent=11 // pred_region
          _
        $region24: #{tpu_custom_call.1} parent=11 // pred_fallthru
          _
        // Predicated region
        $region25: #{tpu_custom_call.1} parent=11 // pred_check
          %p287 = pneg %p153
        $region26: #{tpu_custom_call.1} parent=11 // pred_check_branch
          %289 = sbr.rel (%p287) target = $region28
        $region27: #{tpu_custom_call.1} parent=11 // pred_region
          _
        $region28: #{tpu_custom_call.1} parent=11 // pred_fallthru
          _
        // Predicated region
        $region29: #{tpu_custom_call.1} parent=11 // pred_check
          %p290 = pneg %p174
        $region30: #{tpu_custom_call.1} parent=11 // pred_check_branch
          %292 = sbr.rel (%p290) target = $region32
        $region31: #{tpu_custom_call.1} parent=11 // pred_region
          %294 = vsyncadd [#allocation5], 0
          %s295 = sshll.u32 %s6, 4
          %s296 = int_to_ptr.hbm [resolvable:$true] %s295
          %s297 = sshll.u32 [#allocation4], 4
          %s298 = int_to_ptr.vmem [resolvable:$true] %s297
          %303 = dma.hbm_to_vmem [thread:$0]  %s296, 3584, %s298, [#allocation5], 128, 128, 8
        $region32: #{tpu_custom_call.1} parent=11 // pred_fallthru
          _
        // Predicated region
        $region33: #{tpu_custom_call.1} parent=11 // pred_check
          %p304 = pneg %p195
        $region34: #{tpu_custom_call.1} parent=11 // pred_check_branch
          %306 = sbr.rel (%p304) target = $region36
        $region35: #{tpu_custom_call.1} parent=11 // pred_region
          _
        $region36: #{tpu_custom_call.1} parent=11 // pred_fallthru
          _
        // Predicated region
        $region37: #{tpu_custom_call.1} parent=11 // pred_check
          %p307 = pneg %p216
        $region38: #{tpu_custom_call.1} parent=11 // pred_check_branch
          %309 = sbr.rel (%p307) target = $region40
        $region39: #{tpu_custom_call.1} parent=11 // pred_region
          _
        $region40: #{tpu_custom_call.1} parent=11 // pred_fallthru
          _
        // Predicated region
        $region41: #{tpu_custom_call.1} parent=11 // pred_check
          %p310 = pneg %p237
        $region42: #{tpu_custom_call.1} parent=11 // pred_check_branch
          %312 = sbr.rel (%p310) target = $region44
        $region43: #{tpu_custom_call.1} parent=11 // pred_region
          _
        $region44: #{tpu_custom_call.1} parent=11 // pred_fallthru
          _
      $region12: #{tpu_custom_call.1} parent=5 // pred_fallthru
        _
      %p313 = scmp.lt.s32.totalorder %s17, 2
      // Predicated region
      $region45: #{tpu_custom_call.1} parent=5 // pred_check
        %p314 = pneg %p313
      $region46: #{tpu_custom_call.1} parent=5 // pred_check_branch
        %316 = sbr.rel (%p314) target = $region48
      $region47: #{tpu_custom_call.1} parent=5 // pred_region
        // Predicated region
        $region49: #{tpu_custom_call.1} parent=47 // pred_check
          %p317 = pneg %p37
        $region50: #{tpu_custom_call.1} parent=47 // pred_check_branch
          %319 = sbr.rel (%p317) target = $region52
        $region51: #{tpu_custom_call.1} parent=47 // pred_region
          %s320 = smul.u32 17, %s17
          %p321 = scmp.lt.s32.totalorder %s320, 33
          %s322 = scalar_select %p321, %s320, 33
          %s323 = smul.addr %s322, 8
          %s324 = scalar_lea.vmem %s0, %s323
          %s325 = smul.u32 17, %s17
        $region52: #{tpu_custom_call.1} parent=47 // pred_fallthru
          _
        // Predicated region
        $region53: #{tpu_custom_call.1} parent=47 // pred_check
          %p326 = pneg %p63
        $region54: #{tpu_custom_call.1} parent=47 // pred_check_branch
          %328 = sbr.rel (%p326) target = $region56
        $region55: #{tpu_custom_call.1} parent=47 // pred_region
          %s329 = smul.u32 17, %s17
          %p330 = scmp.lt.s32.totalorder %s329, 33
          %s331 = scalar_select %p330, %s329, 33
          %s332 = smul.addr %s331, 8
          %s333 = scalar_lea.vmem %s1, %s332
          %s334 = smul.u32 17, %s17
        $region56: #{tpu_custom_call.1} parent=47 // pred_fallthru
          _
      $region48: #{tpu_custom_call.1} parent=5 // pred_fallthru
        _
      %p335 = scmp.le.s32.totalorder 1, %s17
      %p336 = scmp.lt.s32.totalorder %s17, 3
      %p337 = pnand %p335, %p336
      %p338 = pneg %p337
      // Predicated region
      $region57: #{tpu_custom_call.1} parent=5 // pred_check
        _
      $region58: #{tpu_custom_call.1} parent=5 // pred_check_branch
        %340 = sbr.rel (%p337) target = $region60
      $region59: #{tpu_custom_call.1} parent=5 // pred_region
        %s341 = ssub.s32 %s17, 1
        // Predicated region
        $region61: #{tpu_custom_call.1} parent=59 // pred_check
          %p342 = pneg %p174
        $region62: #{tpu_custom_call.1} parent=59 // pred_check_branch
          %344 = sbr.rel (%p342) target = $region64
        $region63: #{tpu_custom_call.1} parent=59 // pred_region
          %346 = dma.done [#allocation5], 3584
        $region64: #{tpu_custom_call.1} parent=59 // pred_fallthru
          _
        %s347 = smul.u32 17, %s22
        %p348 = scmp.lt.s32.totalorder %s347, 33
        %s349 = scalar_select %p348, %s347, 33
        %s350 = smul.addr %s349, 8
        %s351 = scalar_lea.vmem %s0, %s350
        %p352 = pneg %p43
        %p353 = pneg %p40
        %s354 = smul.u32 17, %s22
        %p355 = scmp.lt.s32.totalorder %s354, 33
        %s356 = scalar_select %p355, %s354, 33
        %s357 = smul.addr %s356, 8
        %s358 = scalar_lea.vmem %s1, %s357
        %p359 = pneg %p69
        %p360 = pneg %p66
        %p361 = pneg %p90
        %p362 = pneg %p87
        %p363 = pneg %p111
        %p364 = pneg %p108
        %p365 = pneg %p132
        %p366 = pneg %p129
        %p367 = pneg %p153
        %p368 = pneg %p150
        %p369 = pneg %p174
        %p370 = pneg %p171
        %p371 = pneg %p195
        %p372 = pneg %p192
        %p373 = pneg %p216
        %p374 = pneg %p213
        %p375 = pneg %p237
        %p376 = pneg %p234
        %p377 = pneg %p263
        %p378 = pneg %p260
        %p379 = scmp.lt.s32.totalorder %s22, 1
        %s380 = scalar_select %p379, %s22, 1
        %s381 = smul.addr %s380, 8
        %s382 = scalar_lea.vmem %s10, %s381
        %s383 = smul.u32 17, %s22
        %p384 = scmp.lt.s32.totalorder %s383, 33
        %s385 = scalar_select %p384, %s383, 33
        %s386 = smul.addr %s385, 8
        %s387 = scalar_lea.vmem %s0, %s386
        %s388 = smul.u32 17, %s22
        %s389 = smul.u32 17, %s22
        %p390 = scmp.lt.s32.totalorder %s389, 33
        %s391 = scalar_select %p390, %s389, 33
        %s392 = smul.addr %s391, 8
        %s393 = scalar_lea.vmem %s1, %s392
        %s394 = smul.u32 17, %s22
        %p395 = scmp.lt.s32.totalorder %s22, 1
        %s396 = scalar_select %p395, %s22, 1
        %s397 = smul.addr %s396, 8
        %s398 = scalar_lea.vmem %s10, %s397
        %v399 = vld [vmem:[%s387] sm:$0xff]
        %v400 = vld [vmem:[%s387 + $0x8] sm:$0xff]
        %v401 = vld [vmem:[%s387 + $0x10] sm:$0xff]
        %v402 = vld [vmem:[%s387 + $0x18] sm:$0xff]
        %v403 = vld [vmem:[%s387 + $0x20] sm:$0xff]
        %v404 = vld [vmem:[%s387 + $0x28] sm:$0xff]
        %v405 = vld [vmem:[%s387 + $0x30] sm:$0xff]
        %v406 = vld [vmem:[%s387 + $0x38] sm:$0xff]
        %v407 = vld [vmem:[%s387 + $0x40] sm:$0xff]
        %v408 = vld [vmem:[%s387 + $0x48] sm:$0xff]
        %v409 = vld [vmem:[%s387 + $0x50] sm:$0xff]
        %v410 = vld [vmem:[%s387 + $0x58] sm:$0xff]
        %v411 = vld [vmem:[%s387 + $0x60] sm:$0xff]
        %v412 = vld [vmem:[%s387 + $0x68] sm:$0xff]
        %v413 = vld [vmem:[%s387 + $0x70] sm:$0xff]
        %v414 = vld [vmem:[%s387 + $0x78] sm:$0xff]
        %v415 = vld [vmem:[%s387 + $0x80] sm:$0xff]
        %v416 = vld [vmem:[%s2] sm:$0xff]
        %v417 = vld [vmem:[%s2 + $0x8] sm:$0xff]
        %v418 = vld [vmem:[%s2 + $0x10] sm:$0xff]
        %v419 = vld [vmem:[%s2 + $0x18] sm:$0xff]
        %v420 = vld [vmem:[%s2 + $0x20] sm:$0xff]
        %v421 = vld [vmem:[%s2 + $0x28] sm:$0xff]
        %v422 = vld [vmem:[%s2 + $0x30] sm:$0xff]
        %v423 = vld [vmem:[%s2 + $0x38] sm:$0xff]
        %v424 = vld [vmem:[%s2 + $0x40] sm:$0xff]
        %v425 = vld [vmem:[%s2 + $0x48] sm:$0xff]
        %v426 = vld [vmem:[%s2 + $0x50] sm:$0xff]
        %v427 = vld [vmem:[%s2 + $0x58] sm:$0xff]
        %v428 = vld [vmem:[%s2 + $0x60] sm:$0xff]
        %v429 = vld [vmem:[%s2 + $0x68] sm:$0xff]
        %v430 = vld [vmem:[%s2 + $0x70] sm:$0xff]
        %v431 = vld [vmem:[%s2 + $0x78] sm:$0xff]
        %432 = vmatpush.msra.mxu0 %v431
        %433 = vmatpush.msra.mxu0 %v430
        %434 = vmatpush.msra.mxu0 %v429
        %435 = vmatpush.msra.mxu0 %v428
        %436 = vmatpush.msra.mxu0 %v427
        %437 = vmatpush.msra.mxu0 %v426
        %438 = vmatpush.msra.mxu0 %v425
        %439 = vmatpush.msra.mxu0 %v424
        %440 = vmatpush.msra.mxu0 %v423
        %441 = vmatpush.msra.mxu0 %v422
        %442 = vmatpush.msra.mxu0 %v421
        %443 = vmatpush.msra.mxu0 %v420
        %444 = vmatpush.msra.mxu0 %v419
        %445 = vmatpush.msra.mxu0 %v418
        %446 = vmatpush.msra.mxu0 %v417
        %447 = vmatpush.msra.mxu0 %v416
        %448 = vmatmul.f32.gmra.mxu0 %v399
        %v449 = vpop.f32.mrf.mxu0
        %v450 = vadd.f32 0.0, %v449
        %451 = vmatmul.f32.gmra.mxu0 %v400
        %v452 = vpop.f32.mrf.mxu0
        %v453 = vadd.f32 0.0, %v452
        %454 = vmatmul.f32.gmra.mxu0 %v401
        %v455 = vpop.f32.mrf.mxu0
        %v456 = vadd.f32 0.0, %v455
        %457 = vmatmul.f32.gmra.mxu0 %v402
        %v458 = vpop.f32.mrf.mxu0
        %v459 = vadd.f32 0.0, %v458
        %460 = vmatmul.f32.gmra.mxu0 %v403
        %v461 = vpop.f32.mrf.mxu0
        %v462 = vadd.f32 0.0, %v461
        %463 = vmatmul.f32.gmra.mxu0 %v404
        %v464 = vpop.f32.mrf.mxu0
        %v465 = vadd.f32 0.0, %v464
        %466 = vmatmul.f32.gmra.mxu0 %v405
        %v467 = vpop.f32.mrf.mxu0
        %v468 = vadd.f32 0.0, %v467
        %469 = vmatmul.f32.gmra.mxu0 %v406
        %v470 = vpop.f32.mrf.mxu0
        %v471 = vadd.f32 0.0, %v470
        %472 = vmatmul.f32.gmra.mxu0 %v407
        %v473 = vpop.f32.mrf.mxu0
        %v474 = vadd.f32 0.0, %v473
        %475 = vmatmul.f32.gmra.mxu0 %v408
        %v476 = vpop.f32.mrf.mxu0
        %v477 = vadd.f32 0.0, %v476
        %478 = vmatmul.f32.gmra.mxu0 %v409
        %v479 = vpop.f32.mrf.mxu0
        %v480 = vadd.f32 0.0, %v479
        %481 = vmatmul.f32.gmra.mxu0 %v410
        %v482 = vpop.f32.mrf.mxu0
        %v483 = vadd.f32 0.0, %v482
        %484 = vmatmul.f32.gmra.mxu0 %v411
        %v485 = vpop.f32.mrf.mxu0
        %v486 = vadd.f32 0.0, %v485
        %487 = vmatmul.f32.gmra.mxu0 %v412
        %v488 = vpop.f32.mrf.mxu0
        %v489 = vadd.f32 0.0, %v488
        %490 = vmatmul.f32.gmra.mxu0 %v413
        %v491 = vpop.f32.mrf.mxu0
        %v492 = vadd.f32 0.0, %v491
        %493 = vmatmul.f32.gmra.mxu0 %v414
        %v494 = vpop.f32.mrf.mxu0
        %v495 = vadd.f32 0.0, %v494
        %496 = vmatmul.f32.gmra.mxu0 %v415
        %v497 = vpop.f32.mrf.mxu0
        %v498 = vadd.f32 0.0, %v497
        %499 = vdwg.mxu0
        %v500 = vld [vmem:[%s393] sm:$0xff]
        %v501 = vld [vmem:[%s393 + $0x8] sm:$0xff]
        %v502 = vld [vmem:[%s393 + $0x10] sm:$0xff]
        %v503 = vld [vmem:[%s393 + $0x18] sm:$0xff]
        %v504 = vld [vmem:[%s393 + $0x20] sm:$0xff]
        %v505 = vld [vmem:[%s393 + $0x28] sm:$0xff]
        %v506 = vld [vmem:[%s393 + $0x30] sm:$0xff]
        %v507 = vld [vmem:[%s393 + $0x38] sm:$0xff]
        %v508 = vld [vmem:[%s393 + $0x40] sm:$0xff]
        %v509 = vld [vmem:[%s393 + $0x48] sm:$0xff]
        %v510 = vld [vmem:[%s393 + $0x50] sm:$0xff]
        %v511 = vld [vmem:[%s393 + $0x58] sm:$0xff]
        %v512 = vld [vmem:[%s393 + $0x60] sm:$0xff]
        %v513 = vld [vmem:[%s393 + $0x68] sm:$0xff]
        %v514 = vld [vmem:[%s393 + $0x70] sm:$0xff]
        %v515 = vld [vmem:[%s393 + $0x78] sm:$0xff]
        %v516 = vld [vmem:[%s393 + $0x80] sm:$0xff]
        %517 = vmatpush.msra.mxu0 %v431
        %518 = vmatpush.msra.mxu0 %v430
        %519 = vmatpush.msra.mxu0 %v429
        %520 = vmatpush.msra.mxu0 %v428
        %521 = vmatpush.msra.mxu0 %v427
        %522 = vmatpush.msra.mxu0 %v426
        %523 = vmatpush.msra.mxu0 %v425
        %524 = vmatpush.msra.mxu0 %v424
        %525 = vmatpush.msra.mxu0 %v423
        %526 = vmatpush.msra.mxu0 %v422
        %527 = vmatpush.msra.mxu0 %v421
        %528 = vmatpush.msra.mxu0 %v420
        %529 = vmatpush.msra.mxu0 %v419
        %530 = vmatpush.msra.mxu0 %v418
        %531 = vmatpush.msra.mxu0 %v417
        %532 = vmatpush.msra.mxu0 %v416
        %533 = vmatmul.f32.gmra.mxu0 %v500
        %v534 = vpop.f32.mrf.mxu0
        %v535 = vadd.f32 0.0, %v534
        %536 = vmatmul.f32.gmra.mxu0 %v501
        %v537 = vpop.f32.mrf.mxu0
        %v538 = vadd.f32 0.0, %v537
        %539 = vmatmul.f32.gmra.mxu0 %v502
        %v540 = vpop.f32.mrf.mxu0
        %v541 = vadd.f32 0.0, %v540
        %542 = vmatmul.f32.gmra.mxu0 %v503
        %v543 = vpop.f32.mrf.mxu0
        %v544 = vadd.f32 0.0, %v543
        %545 = vmatmul.f32.gmra.mxu0 %v504
        %v546 = vpop.f32.mrf.mxu0
        %v547 = vadd.f32 0.0, %v546
        %548 = vmatmul.f32.gmra.mxu0 %v505
        %v549 = vpop.f32.mrf.mxu0
        %v550 = vadd.f32 0.0, %v549
        %551 = vmatmul.f32.gmra.mxu0 %v506
        %v552 = vpop.f32.mrf.mxu0
        %v553 = vadd.f32 0.0, %v552
        %554 = vmatmul.f32.gmra.mxu0 %v507
        %v555 = vpop.f32.mrf.mxu0
        %v556 = vadd.f32 0.0, %v555
        %557 = vmatmul.f32.gmra.mxu0 %v508
        %v558 = vpop.f32.mrf.mxu0
        %v559 = vadd.f32 0.0, %v558
        %560 = vmatmul.f32.gmra.mxu0 %v509
        %v561 = vpop.f32.mrf.mxu0
        %v562 = vadd.f32 0.0, %v561
        %563 = vmatmul.f32.gmra.mxu0 %v510
        %v564 = vpop.f32.mrf.mxu0
        %v565 = vadd.f32 0.0, %v564
        %566 = vmatmul.f32.gmra.mxu0 %v511
        %v567 = vpop.f32.mrf.mxu0
        %v568 = vadd.f32 0.0, %v567
        %569 = vmatmul.f32.gmra.mxu0 %v512
        %v570 = vpop.f32.mrf.mxu0
        %v571 = vadd.f32 0.0, %v570
        %572 = vmatmul.f32.gmra.mxu0 %v513
        %v573 = vpop.f32.mrf.mxu0
        %v574 = vadd.f32 0.0, %v573
        %575 = vmatmul.f32.gmra.mxu0 %v514
        %v576 = vpop.f32.mrf.mxu0
        %v577 = vadd.f32 0.0, %v576
        %578 = vmatmul.f32.gmra.mxu0 %v515
        %v579 = vpop.f32.mrf.mxu0
        %v580 = vadd.f32 0.0, %v579
        %581 = vmatmul.f32.gmra.mxu0 %v516
        %v582 = vpop.f32.mrf.mxu0
        %v583 = vadd.f32 0.0, %v582
        %584 = vdwg.mxu0
        %v585 = vmax.f32 %v450, %v535
        %v586 = vmax.f32 %v453, %v538
        %v587 = vmax.f32 %v456, %v541
        %v588 = vmax.f32 %v459, %v544
        %v589 = vmax.f32 %v462, %v547
        %v590 = vmax.f32 %v465, %v550
        %v591 = vmax.f32 %v468, %v553
        %v592 = vmax.f32 %v471, %v556
        %v593 = vmax.f32 %v474, %v559
        %v594 = vmax.f32 %v477, %v562
        %v595 = vmax.f32 %v480, %v565
        %v596 = vmax.f32 %v483, %v568
        %v597 = vmax.f32 %v486, %v571
        %v598 = vmax.f32 %v489, %v574
        %v599 = vmax.f32 %v492, %v577
        %v600 = vmax.f32 %v495, %v580
        %v601 = vmax.f32 %v498, %v583
        %v602 = vld [vmem:[%s3] sm:$0x1]
        %v604 = vperm.slane %v602, 0
        %v606 = vadd.f32 %v585, %v604
        %v607 = vadd.f32 %v586, %v604
        %v608 = vadd.f32 %v587, %v604
        %v609 = vadd.f32 %v588, %v604
        %v610 = vadd.f32 %v589, %v604
        %v611 = vadd.f32 %v590, %v604
        %v612 = vadd.f32 %v591, %v604
        %v613 = vadd.f32 %v592, %v604
        %v614 = vadd.f32 %v593, %v604
        %v615 = vadd.f32 %v594, %v604
        %v616 = vadd.f32 %v595, %v604
        %v617 = vadd.f32 %v596, %v604
        %v618 = vadd.f32 %v597, %v604
        %v619 = vadd.f32 %v598, %v604
        %v620 = vadd.f32 %v599, %v604
        %v621 = vadd.f32 %v600, %v604
        %v622 = vadd.f32 %v601, %v604
        %v623 = vmax.f32 %v606, 0.0
        %v624 = vmax.f32 %v607, 0.0
        %v625 = vmax.f32 %v608, 0.0
        %v626 = vmax.f32 %v609, 0.0
        %v627 = vmax.f32 %v610, 0.0
        %v628 = vmax.f32 %v611, 0.0
        %v629 = vmax.f32 %v612, 0.0
        %v630 = vmax.f32 %v613, 0.0
        %v631 = vmax.f32 %v614, 0.0
        %v632 = vmax.f32 %v615, 0.0
        %v633 = vmax.f32 %v616, 0.0
        %v634 = vmax.f32 %v617, 0.0
        %v635 = vmax.f32 %v618, 0.0
        %v636 = vmax.f32 %v619, 0.0
        %v637 = vmax.f32 %v620, 0.0
        %v638 = vmax.f32 %v621, 0.0
        %v639 = vmax.f32 %v622, 0.0
        %vm640 = vcmask 523264
        %641 = vst.msk [vmem:[#allocation2] sm:$0xff] %vm640, %v623
        %642 = vst.msk [vmem:[#allocation2 + $0x8] sm:$0xff] %vm640, %v624
        %643 = vst.msk [vmem:[#allocation2 + $0x10] sm:$0xff] %vm640, %v625
        %644 = vst.msk [vmem:[#allocation2 + $0x18] sm:$0xff] %vm640, %v626
        %645 = vst.msk [vmem:[#allocation2 + $0x20] sm:$0xff] %vm640, %v627
        %646 = vst.msk [vmem:[#allocation2 + $0x28] sm:$0xff] %vm640, %v628
        %647 = vst.msk [vmem:[#allocation2 + $0x30] sm:$0xff] %vm640, %v629
        %648 = vst.msk [vmem:[#allocation2 + $0x38] sm:$0xff] %vm640, %v630
        %649 = vst.msk [vmem:[#allocation2 + $0x40] sm:$0xff] %vm640, %v631
        %650 = vst.msk [vmem:[#allocation2 + $0x48] sm:$0xff] %vm640, %v632
        %651 = vst.msk [vmem:[#allocation2 + $0x50] sm:$0xff] %vm640, %v633
        %652 = vst.msk [vmem:[#allocation2 + $0x58] sm:$0xff] %vm640, %v634
        %653 = vst.msk [vmem:[#allocation2 + $0x60] sm:$0xff] %vm640, %v635
        %654 = vst.msk [vmem:[#allocation2 + $0x68] sm:$0xff] %vm640, %v636
        %655 = vst.msk [vmem:[#allocation2 + $0x70] sm:$0xff] %vm640, %v637
        %656 = vst.msk [vmem:[#allocation2 + $0x78] sm:$0xff] %vm640, %v638
        %657 = vst.msk [vmem:[#allocation2 + $0x80] sm:$0xff] %vm640, %v639
        %v658 = vld [vmem:[#allocation2] sm:$0xff]
        %v659 = vld [vmem:[#allocation2 + $0x8] sm:$0xff]
        %v660 = vld [vmem:[#allocation2 + $0x10] sm:$0xff]
        %v661 = vld [vmem:[#allocation2 + $0x18] sm:$0xff]
        %v662 = vld [vmem:[#allocation2 + $0x20] sm:$0xff]
        %v663 = vld [vmem:[#allocation2 + $0x28] sm:$0xff]
        %v664 = vld [vmem:[#allocation2 + $0x30] sm:$0xff]
        %v665 = vld [vmem:[#allocation2 + $0x38] sm:$0xff]
        %v666 = vld [vmem:[#allocation2 + $0x40] sm:$0xff]
        %v667 = vld [vmem:[#allocation2 + $0x48] sm:$0xff]
        %v668 = vld [vmem:[#allocation2 + $0x50] sm:$0xff]
        %v669 = vld [vmem:[#allocation2 + $0x58] sm:$0xff]
        %v670 = vld [vmem:[#allocation2 + $0x60] sm:$0xff]
        %v671 = vld [vmem:[#allocation2 + $0x68] sm:$0xff]
        %v672 = vld [vmem:[%s4] sm:$0xff]
        %v673 = vld [vmem:[%s4 + $0x8] sm:$0xff]
        %v674 = vld [vmem:[%s4 + $0x10] sm:$0xff]
        %v675 = vld [vmem:[%s4 + $0x18] sm:$0xff]
        %v676 = vld [vmem:[%s4 + $0x20] sm:$0xff]
        %v677 = vld [vmem:[%s4 + $0x28] sm:$0xff]
        %v678 = vld [vmem:[%s4 + $0x30] sm:$0xff]
        %v679 = vld [vmem:[%s4 + $0x38] sm:$0xff]
        %v680 = vld [vmem:[#allocation2 + $0x70] sm:$0xff]
        %s681 = scalar_lea.vmem %s4, 64
        %v682 = vld [vmem:[%s681] sm:$0xff]
        %v683 = vld [vmem:[%s681 + $0x8] sm:$0xff]
        %v684 = vld [vmem:[%s681 + $0x10] sm:$0xff]
        %v685 = vld [vmem:[%s681 + $0x18] sm:$0xff]
        %v686 = vld [vmem:[%s681 + $0x20] sm:$0xff]
        %v687 = vld [vmem:[%s681 + $0x28] sm:$0xff]
        %v688 = vld [vmem:[%s681 + $0x30] sm:$0xff]
        %v689 = vld [vmem:[%s681 + $0x38] sm:$0xff]
        %v691 = vsel %vm640, %v659, 0
        %v694 = vsel %vm640, %v660, 0
        %v697 = vsel %vm640, %v661, 0
        %v700 = vsel %vm640, %v662, 0
        %v703 = vsel %vm640, %v663, 0
        %v706 = vsel %vm640, %v664, 0
        %v709 = vsel %vm640, %v665, 0
        %v712 = vsel %vm640, %v666, 0
        %v715 = vsel %vm640, %v667, 0
        %v718 = vsel %vm640, %v668, 0
        %v721 = vsel %vm640, %v669, 0
        %v724 = vsel %vm640, %v670, 0
        %v727 = vsel %vm640, %v671, 0
        %v730 = vsel %vm640, %v680, 0
        %732 = vmatpush.msra.mxu0 0.0
        %733 = vmatpush.msra.mxu0 0.0
        %734 = vmatpush.msra.mxu0 0.0
        %735 = vmatpush.msra.mxu0 0.0
        %736 = vmatpush.msra.mxu0 0.0
        %737 = vmatpush.msra.mxu0 0.0
        %738 = vmatpush.msra.mxu0 0.0
        %739 = vmatpush.msra.mxu0 0.0
        %740 = vmatpush.msra.mxu0 %v689
        %741 = vmatpush.msra.mxu0 %v688
        %742 = vmatpush.msra.mxu0 %v687
        %743 = vmatpush.msra.mxu0 %v686
        %744 = vmatpush.msra.mxu0 %v685
        %745 = vmatpush.msra.mxu0 %v684
        %746 = vmatpush.msra.mxu0 %v683
        %747 = vmatpush.msra.mxu0 %v682
        %748 = vmatmul.f32.gmra.mxu0 %v691
        %v749 = vpop.f32.mrf.mxu0
        %v750 = vadd.f32 0.0, %v749
        %751 = vmatmul.f32.gmra.mxu0 %v694
        %v752 = vpop.f32.mrf.mxu0
        %v753 = vadd.f32 0.0, %v752
        %754 = vmatmul.f32.gmra.mxu0 %v697
        %v755 = vpop.f32.mrf.mxu0
        %v756 = vadd.f32 0.0, %v755
        %757 = vmatmul.f32.gmra.mxu0 %v700
        %v758 = vpop.f32.mrf.mxu0
        %v759 = vadd.f32 0.0, %v758
        %760 = vmatmul.f32.gmra.mxu0 %v703
        %v761 = vpop.f32.mrf.mxu0
        %v762 = vadd.f32 0.0, %v761
        %763 = vmatmul.f32.gmra.mxu0 %v706
        %v764 = vpop.f32.mrf.mxu0
        %v765 = vadd.f32 0.0, %v764
        %766 = vmatmul.f32.gmra.mxu0 %v709
        %v767 = vpop.f32.mrf.mxu0
        %v768 = vadd.f32 0.0, %v767
        %769 = vmatmul.f32.gmra.mxu0 %v712
        %v770 = vpop.f32.mrf.mxu0
        %v771 = vadd.f32 0.0, %v770
        %772 = vmatmul.f32.gmra.mxu0 %v715
        %v773 = vpop.f32.mrf.mxu0
        %v774 = vadd.f32 0.0, %v773
        %775 = vmatmul.f32.gmra.mxu0 %v718
        %v776 = vpop.f32.mrf.mxu0
        %v777 = vadd.f32 0.0, %v776
        %778 = vmatmul.f32.gmra.mxu0 %v721
        %v779 = vpop.f32.mrf.mxu0
        %v780 = vadd.f32 0.0, %v779
        %781 = vmatmul.f32.gmra.mxu0 %v724
        %v782 = vpop.f32.mrf.mxu0
        %v783 = vadd.f32 0.0, %v782
        %784 = vmatmul.f32.gmra.mxu0 %v727
        %v785 = vpop.f32.mrf.mxu0
        %v786 = vadd.f32 0.0, %v785
        %787 = vmatmul.f32.gmra.mxu0 %v730
        %v788 = vpop.f32.mrf.mxu0
        %v789 = vadd.f32 0.0, %v788
        %790 = vdwg.mxu0
        %v792 = vsel %vm640, %v658, 0
        %794 = vmatpush.msra.mxu0 0.0
        %795 = vmatpush.msra.mxu0 0.0
        %796 = vmatpush.msra.mxu0 0.0
        %797 = vmatpush.msra.mxu0 0.0
        %798 = vmatpush.msra.mxu0 0.0
        %799 = vmatpush.msra.mxu0 0.0
        %800 = vmatpush.msra.mxu0 0.0
        %801 = vmatpush.msra.mxu0 0.0
        %802 = vmatpush.msra.mxu0 %v679
        %803 = vmatpush.msra.mxu0 %v678
        %804 = vmatpush.msra.mxu0 %v677
        %805 = vmatpush.msra.mxu0 %v676
        %806 = vmatpush.msra.mxu0 %v675
        %807 = vmatpush.msra.mxu0 %v674
        %808 = vmatpush.msra.mxu0 %v673
        %809 = vmatpush.msra.mxu0 %v672
        %810 = vmatmul.f32.gmra.mxu0 %v792
        %v811 = vpop.f32.mrf.mxu0
        %v812 = vadd.f32 %v750, %v811
        %813 = vmatmul.f32.gmra.mxu0 %v691
        %v814 = vpop.f32.mrf.mxu0
        %v815 = vadd.f32 %v753, %v814
        %816 = vmatmul.f32.gmra.mxu0 %v694
        %v817 = vpop.f32.mrf.mxu0
        %v818 = vadd.f32 %v756, %v817
        %819 = vmatmul.f32.gmra.mxu0 %v697
        %v820 = vpop.f32.mrf.mxu0
        %v821 = vadd.f32 %v759, %v820
        %822 = vmatmul.f32.gmra.mxu0 %v700
        %v823 = vpop.f32.mrf.mxu0
        %v824 = vadd.f32 %v762, %v823
        %825 = vmatmul.f32.gmra.mxu0 %v703
        %v826 = vpop.f32.mrf.mxu0
        %v827 = vadd.f32 %v765, %v826
        %828 = vmatmul.f32.gmra.mxu0 %v706
        %v829 = vpop.f32.mrf.mxu0
        %v830 = vadd.f32 %v768, %v829
        %831 = vmatmul.f32.gmra.mxu0 %v709
        %v832 = vpop.f32.mrf.mxu0
        %v833 = vadd.f32 %v771, %v832
        %834 = vmatmul.f32.gmra.mxu0 %v712
        %v835 = vpop.f32.mrf.mxu0
        %v836 = vadd.f32 %v774, %v835
        %837 = vmatmul.f32.gmra.mxu0 %v715
        %v838 = vpop.f32.mrf.mxu0
        %v839 = vadd.f32 %v777, %v838
        %840 = vmatmul.f32.gmra.mxu0 %v718
        %v841 = vpop.f32.mrf.mxu0
        %v842 = vadd.f32 %v780, %v841
        %843 = vmatmul.f32.gmra.mxu0 %v721
        %v844 = vpop.f32.mrf.mxu0
        %v845 = vadd.f32 %v783, %v844
        %846 = vmatmul.f32.gmra.mxu0 %v724
        %v847 = vpop.f32.mrf.mxu0
        %v848 = vadd.f32 %v786, %v847
        %849 = vmatmul.f32.gmra.mxu0 %v727
        %v850 = vpop.f32.mrf.mxu0
        %v851 = vadd.f32 %v789, %v850
        %852 = vdwg.mxu0
        %v853 = vld [vmem:[#allocation2 + $0x10] sm:$0xff]
        %v854 = vld [vmem:[#allocation2 + $0x18] sm:$0xff]
        %v855 = vld [vmem:[#allocation2 + $0x20] sm:$0xff]
        %v856 = vld [vmem:[#allocation2 + $0x28] sm:$0xff]
        %v857 = vld [vmem:[#allocation2 + $0x30] sm:$0xff]
        %v858 = vld [vmem:[#allocation2 + $0x38] sm:$0xff]
        %v859 = vld [vmem:[#allocation2 + $0x40] sm:$0xff]
        %v860 = vld [vmem:[#allocation2 + $0x48] sm:$0xff]
        %v861 = vld [vmem:[#allocation2 + $0x50] sm:$0xff]
        %v862 = vld [vmem:[#allocation2 + $0x58] sm:$0xff]
        %v863 = vld [vmem:[#allocation2 + $0x60] sm:$0xff]
        %v864 = vld [vmem:[#allocation2 + $0x68] sm:$0xff]
        %v865 = vld [vmem:[#allocation2 + $0x70] sm:$0xff]
        %v866 = vld [vmem:[#allocation2 + $0x78] sm:$0xff]
        %s867 = scalar_lea.vmem %s4, 128
        %v868 = vld [vmem:[%s867] sm:$0xff]
        %v869 = vld [vmem:[%s867 + $0x8] sm:$0xff]
        %v870 = vld [vmem:[%s867 + $0x10] sm:$0xff]
        %v871 = vld [vmem:[%s867 + $0x18] sm:$0xff]
        %v872 = vld [vmem:[%s867 + $0x20] sm:$0xff]
        %v873 = vld [vmem:[%s867 + $0x28] sm:$0xff]
        %v874 = vld [vmem:[%s867 + $0x30] sm:$0xff]
        %v875 = vld [vmem:[%s867 + $0x38] sm:$0xff]
        %v877 = vsel %vm640, %v853, 0
        %v880 = vsel %vm640, %v854, 0
        %v883 = vsel %vm640, %v855, 0
        %v886 = vsel %vm640, %v856, 0
        %v889 = vsel %vm640, %v857, 0
        %v892 = vsel %vm640, %v858, 0
        %v895 = vsel %vm640, %v859, 0
        %v898 = vsel %vm640, %v860, 0
        %v901 = vsel %vm640, %v861, 0
        %v904 = vsel %vm640, %v862, 0
        %v907 = vsel %vm640, %v863, 0
        %v910 = vsel %vm640, %v864, 0
        %v913 = vsel %vm640, %v865, 0
        %v916 = vsel %vm640, %v866, 0
        %918 = vmatpush.msra.mxu0 0.0
        %919 = vmatpush.msra.mxu0 0.0
        %920 = vmatpush.msra.mxu0 0.0
        %921 = vmatpush.msra.mxu0 0.0
        %922 = vmatpush.msra.mxu0 0.0
        %923 = vmatpush.msra.mxu0 0.0
        %924 = vmatpush.msra.mxu0 0.0
        %925 = vmatpush.msra.mxu0 0.0
        %926 = vmatpush.msra.mxu0 %v875
        %927 = vmatpush.msra.mxu0 %v874
        %928 = vmatpush.msra.mxu0 %v873
        %929 = vmatpush.msra.mxu0 %v872
        %930 = vmatpush.msra.mxu0 %v871
        %931 = vmatpush.msra.mxu0 %v870
        %932 = vmatpush.msra.mxu0 %v869
        %933 = vmatpush.msra.mxu0 %v868
        %934 = vmatmul.f32.gmra.mxu0 %v877
        %v935 = vpop.f32.mrf.mxu0
        %v936 = vadd.f32 0.0, %v935
        %937 = vmatmul.f32.gmra.mxu0 %v880
        %v938 = vpop.f32.mrf.mxu0
        %v939 = vadd.f32 0.0, %v938
        %940 = vmatmul.f32.gmra.mxu0 %v883
        %v941 = vpop.f32.mrf.mxu0
        %v942 = vadd.f32 0.0, %v941
        %943 = vmatmul.f32.gmra.mxu0 %v886
        %v944 = vpop.f32.mrf.mxu0
        %v945 = vadd.f32 0.0, %v944
        %946 = vmatmul.f32.gmra.mxu0 %v889
        %v947 = vpop.f32.mrf.mxu0
        %v948 = vadd.f32 0.0, %v947
        %949 = vmatmul.f32.gmra.mxu0 %v892
        %v950 = vpop.f32.mrf.mxu0
        %v951 = vadd.f32 0.0, %v950
        %952 = vmatmul.f32.gmra.mxu0 %v895
        %v953 = vpop.f32.mrf.mxu0
        %v954 = vadd.f32 0.0, %v953
        %955 = vmatmul.f32.gmra.mxu0 %v898
        %v956 = vpop.f32.mrf.mxu0
        %v957 = vadd.f32 0.0, %v956
        %958 = vmatmul.f32.gmra.mxu0 %v901
        %v959 = vpop.f32.mrf.mxu0
        %v960 = vadd.f32 0.0, %v959
        %961 = vmatmul.f32.gmra.mxu0 %v904
        %v962 = vpop.f32.mrf.mxu0
        %v963 = vadd.f32 0.0, %v962
        %964 = vmatmul.f32.gmra.mxu0 %v907
        %v965 = vpop.f32.mrf.mxu0
        %v966 = vadd.f32 0.0, %v965
        %967 = vmatmul.f32.gmra.mxu0 %v910
        %v968 = vpop.f32.mrf.mxu0
        %v969 = vadd.f32 0.0, %v968
        %970 = vmatmul.f32.gmra.mxu0 %v913
        %v971 = vpop.f32.mrf.mxu0
        %v972 = vadd.f32 0.0, %v971
        %973 = vmatmul.f32.gmra.mxu0 %v916
        %v974 = vpop.f32.mrf.mxu0
        %v975 = vadd.f32 0.0, %v974
        %976 = vdwg.mxu0
        %v977 = vadd.f32 %v812, %v936
        %v978 = vadd.f32 %v815, %v939
        %v979 = vadd.f32 %v818, %v942
        %v980 = vadd.f32 %v821, %v945
        %v981 = vadd.f32 %v824, %v948
        %v982 = vadd.f32 %v827, %v951
        %v983 = vadd.f32 %v830, %v954
        %v984 = vadd.f32 %v833, %v957
        %v985 = vadd.f32 %v836, %v960
        %v986 = vadd.f32 %v839, %v963
        %v987 = vadd.f32 %v842, %v966
        %v988 = vadd.f32 %v845, %v969
        %v989 = vadd.f32 %v848, %v972
        %v990 = vadd.f32 %v851, %v975
        %v991 = vld [vmem:[%s5] sm:$0x1]
        %v993 = vperm.slane %v991, 0
        %v995 = vadd.f32 %v977, %v993
        %v996 = vadd.f32 %v978, %v993
        %v997 = vadd.f32 %v979, %v993
        %v998 = vadd.f32 %v980, %v993
        %v999 = vadd.f32 %v981, %v993
        %v1000 = vadd.f32 %v982, %v993
        %v1001 = vadd.f32 %v983, %v993
        %v1002 = vadd.f32 %v984, %v993
        %v1003 = vadd.f32 %v985, %v993
        %v1004 = vadd.f32 %v986, %v993
        %v1005 = vadd.f32 %v987, %v993
        %v1006 = vadd.f32 %v988, %v993
        %v1007 = vadd.f32 %v989, %v993
        %v1008 = vadd.f32 %v990, %v993
        %v1009 = vmax.f32 %v995, 0.0
        %v1010 = vmax.f32 %v996, 0.0
        %v1011 = vmax.f32 %v997, 0.0
        %v1012 = vmax.f32 %v998, 0.0
        %v1013 = vmax.f32 %v999, 0.0
        %v1014 = vmax.f32 %v1000, 0.0
        %v1015 = vmax.f32 %v1001, 0.0
        %v1016 = vmax.f32 %v1002, 0.0
        %v1017 = vmax.f32 %v1003, 0.0
        %v1018 = vmax.f32 %v1004, 0.0
        %v1019 = vmax.f32 %v1005, 0.0
        %v1020 = vmax.f32 %v1006, 0.0
        %v1021 = vmax.f32 %v1007, 0.0
        %v1022 = vmax.f32 %v1008, 0.0
        %vm1023 = vcmask 261120
        %1024 = vst.msk [vmem:[#allocation3] sm:$0xff] %vm1023, %v1009
        %1025 = vst.msk [vmem:[#allocation3 + $0x8] sm:$0xff] %vm1023, %v1010
        %1026 = vst.msk [vmem:[#allocation3 + $0x10] sm:$0xff] %vm1023, %v1011
        %1027 = vst.msk [vmem:[#allocation3 + $0x18] sm:$0xff] %vm1023, %v1012
        %1028 = vst.msk [vmem:[#allocation3 + $0x20] sm:$0xff] %vm1023, %v1013
        %1029 = vst.msk [vmem:[#allocation3 + $0x28] sm:$0xff] %vm1023, %v1014
        %1030 = vst.msk [vmem:[#allocation3 + $0x30] sm:$0xff] %vm1023, %v1015
        %1031 = vst.msk [vmem:[#allocation3 + $0x38] sm:$0xff] %vm1023, %v1016
        %1032 = vst.msk [vmem:[#allocation3 + $0x40] sm:$0xff] %vm1023, %v1017
        %1033 = vst.msk [vmem:[#allocation3 + $0x48] sm:$0xff] %vm1023, %v1018
        %1034 = vst.msk [vmem:[#allocation3 + $0x50] sm:$0xff] %vm1023, %v1019
        %1035 = vst.msk [vmem:[#allocation3 + $0x58] sm:$0xff] %vm1023, %v1020
        %1036 = vst.msk [vmem:[#allocation3 + $0x60] sm:$0xff] %vm1023, %v1021
        %1037 = vst.msk [vmem:[#allocation3 + $0x68] sm:$0xff] %vm1023, %v1022
        %v1038 = vld [vmem:[#allocation3] sm:$0xff]
        %v1039 = vld [vmem:[#allocation3 + $0x8] sm:$0xff]
        %v1040 = vmax.f32 %v1038, %v1039
        %v1041 = vld [vmem:[#allocation4] sm:$0xff]
        %v1042 = vld [vmem:[#allocation4 + $0x8] sm:$0xff]
        %v1043 = vld [vmem:[#allocation4 + $0x10] sm:$0xff]
        %v1044 = vld [vmem:[#allocation4 + $0x18] sm:$0xff]
        %v1045 = vld [vmem:[#allocation3 + $0x10] sm:$0xff]
        %v1046 = vld [vmem:[#allocation3 + $0x18] sm:$0xff]
        %v1047 = vmax.f32 %v1045, %v1046
        %s1048 = scalar_lea.vmem [#allocation4], 32
        %v1049 = vld [vmem:[%s1048] sm:$0xff]
        %v1050 = vld [vmem:[%s1048 + $0x8] sm:$0xff]
        %v1051 = vld [vmem:[%s1048 + $0x10] sm:$0xff]
        %v1052 = vld [vmem:[%s1048 + $0x18] sm:$0xff]
        %v1054 = vsel %vm1023, %v1047, 0
        %1056 = vmatpush.msra.mxu0 0.0
        %1057 = vmatpush.msra.mxu0 0.0
        %1058 = vmatpush.msra.mxu0 0.0
        %1059 = vmatpush.msra.mxu0 0.0
        %1060 = vmatpush.msra.mxu0 0.0
        %1061 = vmatpush.msra.mxu0 0.0
        %1062 = vmatpush.msra.mxu0 0.0
        %1063 = vmatpush.msra.mxu0 0.0
        %1064 = vmatpush.msra.mxu0 0.0
        %1065 = vmatpush.msra.mxu0 0.0
        %1066 = vmatpush.msra.mxu0 0.0
        %1067 = vmatpush.msra.mxu0 0.0
        %1068 = vmatpush.msra.mxu0 %v1052
        %1069 = vmatpush.msra.mxu0 %v1051
        %1070 = vmatpush.msra.mxu0 %v1050
        %1071 = vmatpush.msra.mxu0 %v1049
        %1072 = vmatmul.f32.gmra.mxu0 %v1054
        %v1073 = vpop.f32.mrf.mxu0
        %v1074 = vadd.f32 0.0, %v1073
        %1075 = vdwg.mxu0
        %v1077 = vsel %vm1023, %v1040, 0
        %1079 = vmatpush.msra.mxu0 0.0
        %1080 = vmatpush.msra.mxu0 0.0
        %1081 = vmatpush.msra.mxu0 0.0
        %1082 = vmatpush.msra.mxu0 0.0
        %1083 = vmatpush.msra.mxu0 0.0
        %1084 = vmatpush.msra.mxu0 0.0
        %1085 = vmatpush.msra.mxu0 0.0
        %1086 = vmatpush.msra.mxu0 0.0
        %1087 = vmatpush.msra.mxu0 0.0
        %1088 = vmatpush.msra.mxu0 0.0
        %1089 = vmatpush.msra.mxu0 0.0
        %1090 = vmatpush.msra.mxu0 0.0
        %1091 = vmatpush.msra.mxu0 %v1044
        %1092 = vmatpush.msra.mxu0 %v1043
        %1093 = vmatpush.msra.mxu0 %v1042
        %1094 = vmatpush.msra.mxu0 %v1041
        %1095 = vmatmul.f32.gmra.mxu0 %v1077
        %v1096 = vpop.f32.mrf.mxu0
        %v1097 = vadd.f32 %v1074, %v1096
        %1098 = vdwg.mxu0
        %v1099 = vld [vmem:[#allocation3 + $0x20] sm:$0xff]
        %v1100 = vld [vmem:[#allocation3 + $0x28] sm:$0xff]
        %v1101 = vmax.f32 %v1099, %v1100
        %s1102 = scalar_lea.vmem [#allocation4], 64
        %v1103 = vld [vmem:[%s1102] sm:$0xff]
        %v1104 = vld [vmem:[%s1102 + $0x8] sm:$0xff]
        %v1105 = vld [vmem:[%s1102 + $0x10] sm:$0xff]
        %v1106 = vld [vmem:[%s1102 + $0x18] sm:$0xff]
        %v1108 = vsel %vm1023, %v1101, 0
        %1110 = vmatpush.msra.mxu0 0.0
        %1111 = vmatpush.msra.mxu0 0.0
        %1112 = vmatpush.msra.mxu0 0.0
        %1113 = vmatpush.msra.mxu0 0.0
        %1114 = vmatpush.msra.mxu0 0.0
        %1115 = vmatpush.msra.mxu0 0.0
        %1116 = vmatpush.msra.mxu0 0.0
        %1117 = vmatpush.msra.mxu0 0.0
        %1118 = vmatpush.msra.mxu0 0.0
        %1119 = vmatpush.msra.mxu0 0.0
        %1120 = vmatpush.msra.mxu0 0.0
        %1121 = vmatpush.msra.mxu0 0.0
        %1122 = vmatpush.msra.mxu0 %v1106
        %1123 = vmatpush.msra.mxu0 %v1105
        %1124 = vmatpush.msra.mxu0 %v1104
        %1125 = vmatpush.msra.mxu0 %v1103
        %1126 = vmatmul.f32.gmra.mxu0 %v1108
        %v1127 = vpop.f32.mrf.mxu0
        %v1128 = vadd.f32 0.0, %v1127
        %1129 = vdwg.mxu0
        %v1130 = vadd.f32 %v1097, %v1128
        %v1131 = vld [vmem:[#allocation3 + $0x30] sm:$0xff]
        %v1132 = vld [vmem:[#allocation3 + $0x38] sm:$0xff]
        %v1133 = vmax.f32 %v1131, %v1132
        %s1134 = scalar_lea.vmem [#allocation4], 96
        %v1135 = vld [vmem:[%s1134] sm:$0xff]
        %v1136 = vld [vmem:[%s1134 + $0x8] sm:$0xff]
        %v1137 = vld [vmem:[%s1134 + $0x10] sm:$0xff]
        %v1138 = vld [vmem:[%s1134 + $0x18] sm:$0xff]
        %v1140 = vsel %vm1023, %v1133, 0
        %1142 = vmatpush.msra.mxu0 0.0
        %1143 = vmatpush.msra.mxu0 0.0
        %1144 = vmatpush.msra.mxu0 0.0
        %1145 = vmatpush.msra.mxu0 0.0
        %1146 = vmatpush.msra.mxu0 0.0
        %1147 = vmatpush.msra.mxu0 0.0
        %1148 = vmatpush.msra.mxu0 0.0
        %1149 = vmatpush.msra.mxu0 0.0
        %1150 = vmatpush.msra.mxu0 0.0
        %1151 = vmatpush.msra.mxu0 0.0
        %1152 = vmatpush.msra.mxu0 0.0
        %1153 = vmatpush.msra.mxu0 0.0
        %1154 = vmatpush.msra.mxu0 %v1138
        %1155 = vmatpush.msra.mxu0 %v1137
        %1156 = vmatpush.msra.mxu0 %v1136
        %1157 = vmatpush.msra.mxu0 %v1135
        %1158 = vmatmul.f32.gmra.mxu0 %v1140
        %v1159 = vpop.f32.mrf.mxu0
        %v1160 = vadd.f32 0.0, %v1159
        %1161 = vdwg.mxu0
        %v1162 = vadd.f32 %v1130, %v1160
        %v1163 = vld [vmem:[#allocation3 + $0x40] sm:$0xff]
        %v1164 = vld [vmem:[#allocation3 + $0x48] sm:$0xff]
        %v1165 = vmax.f32 %v1163, %v1164
        %s1166 = scalar_lea.vmem [#allocation4], 128
        %v1167 = vld [vmem:[%s1166] sm:$0xff]
        %v1168 = vld [vmem:[%s1166 + $0x8] sm:$0xff]
        %v1169 = vld [vmem:[%s1166 + $0x10] sm:$0xff]
        %v1170 = vld [vmem:[%s1166 + $0x18] sm:$0xff]
        %v1172 = vsel %vm1023, %v1165, 0
        %1174 = vmatpush.msra.mxu0 0.0
        %1175 = vmatpush.msra.mxu0 0.0
        %1176 = vmatpush.msra.mxu0 0.0
        %1177 = vmatpush.msra.mxu0 0.0
        %1178 = vmatpush.msra.mxu0 0.0
        %1179 = vmatpush.msra.mxu0 0.0
        %1180 = vmatpush.msra.mxu0 0.0
        %1181 = vmatpush.msra.mxu0 0.0
        %1182 = vmatpush.msra.mxu0 0.0
        %1183 = vmatpush.msra.mxu0 0.0
        %1184 = vmatpush.msra.mxu0 0.0
        %1185 = vmatpush.msra.mxu0 0.0
        %1186 = vmatpush.msra.mxu0 %v1170
        %1187 = vmatpush.msra.mxu0 %v1169
        %1188 = vmatpush.msra.mxu0 %v1168
        %1189 = vmatpush.msra.mxu0 %v1167
        %1190 = vmatmul.f32.gmra.mxu0 %v1172
        %v1191 = vpop.f32.mrf.mxu0
        %v1192 = vadd.f32 0.0, %v1191
        %1193 = vdwg.mxu0
        %v1194 = vadd.f32 %v1162, %v1192
        %v1195 = vld [vmem:[#allocation3 + $0x50] sm:$0xff]
        %v1196 = vld [vmem:[#allocation3 + $0x58] sm:$0xff]
        %v1197 = vmax.f32 %v1195, %v1196
        %s1198 = scalar_lea.vmem [#allocation4], 160
        %v1199 = vld [vmem:[%s1198] sm:$0xff]
        %v1200 = vld [vmem:[%s1198 + $0x8] sm:$0xff]
        %v1201 = vld [vmem:[%s1198 + $0x10] sm:$0xff]
        %v1202 = vld [vmem:[%s1198 + $0x18] sm:$0xff]
        %v1204 = vsel %vm1023, %v1197, 0
        %1206 = vmatpush.msra.mxu0 0.0
        %1207 = vmatpush.msra.mxu0 0.0
        %1208 = vmatpush.msra.mxu0 0.0
        %1209 = vmatpush.msra.mxu0 0.0
        %1210 = vmatpush.msra.mxu0 0.0
        %1211 = vmatpush.msra.mxu0 0.0
        %1212 = vmatpush.msra.mxu0 0.0
        %1213 = vmatpush.msra.mxu0 0.0
        %1214 = vmatpush.msra.mxu0 0.0
        %1215 = vmatpush.msra.mxu0 0.0
        %1216 = vmatpush.msra.mxu0 0.0
        %1217 = vmatpush.msra.mxu0 0.0
        %1218 = vmatpush.msra.mxu0 %v1202
        %1219 = vmatpush.msra.mxu0 %v1201
        %1220 = vmatpush.msra.mxu0 %v1200
        %1221 = vmatpush.msra.mxu0 %v1199
        %1222 = vmatmul.f32.gmra.mxu0 %v1204
        %v1223 = vpop.f32.mrf.mxu0
        %v1224 = vadd.f32 0.0, %v1223
        %1225 = vdwg.mxu0
        %v1226 = vadd.f32 %v1194, %v1224
        %v1227 = vld [vmem:[#allocation3 + $0x60] sm:$0xff]
        %v1228 = vld [vmem:[#allocation3 + $0x68] sm:$0xff]
        %v1229 = vmax.f32 %v1227, %v1228
        %s1230 = scalar_lea.vmem [#allocation4], 192
        %v1231 = vld [vmem:[%s1230] sm:$0xff]
        %v1232 = vld [vmem:[%s1230 + $0x8] sm:$0xff]
        %v1233 = vld [vmem:[%s1230 + $0x10] sm:$0xff]
        %v1234 = vld [vmem:[%s1230 + $0x18] sm:$0xff]
        %v1236 = vsel %vm1023, %v1229, 0
        %1238 = vmatpush.msra.mxu0 0.0
        %1239 = vmatpush.msra.mxu0 0.0
        %1240 = vmatpush.msra.mxu0 0.0
        %1241 = vmatpush.msra.mxu0 0.0
        %1242 = vmatpush.msra.mxu0 0.0
        %1243 = vmatpush.msra.mxu0 0.0
        %1244 = vmatpush.msra.mxu0 0.0
        %1245 = vmatpush.msra.mxu0 0.0
        %1246 = vmatpush.msra.mxu0 0.0
        %1247 = vmatpush.msra.mxu0 0.0
        %1248 = vmatpush.msra.mxu0 0.0
        %1249 = vmatpush.msra.mxu0 0.0
        %1250 = vmatpush.msra.mxu0 %v1234
        %1251 = vmatpush.msra.mxu0 %v1233
        %1252 = vmatpush.msra.mxu0 %v1232
        %1253 = vmatpush.msra.mxu0 %v1231
        %1254 = vmatmul.f32.gmra.mxu0 %v1236
        %v1255 = vpop.f32.mrf.mxu0
        %v1256 = vadd.f32 0.0, %v1255
        %1257 = vdwg.mxu0
        %v1258 = vadd.f32 %v1226, %v1256
        %v1259 = vld [vmem:[%s7] sm:$0x1]
        %v1261 = vperm.slane %v1259, 0
        %v1263 = vadd.f32 %v1258, %v1261
        %v1264 = vld [vmem:[%s8] sm:$0xff]
        %v1265 = vld [vmem:[%s8 + $0x8] sm:$0xff]
        %v1266 = vld [vmem:[%s8 + $0x10] sm:$0xff]
        %v1267 = vld [vmem:[%s8 + $0x18] sm:$0xff]
        %v1268 = vld [vmem:[%s8 + $0x20] sm:$0xff]
        %v1269 = vld [vmem:[%s8 + $0x28] sm:$0xff]
        %v1270 = vld [vmem:[%s8 + $0x30] sm:$0xff]
        %v1271 = vld [vmem:[%s8 + $0x38] sm:$0xff]
        %v1272 = vld [vmem:[%s8 + $0x40] sm:$0xff]
        %v1273 = vld [vmem:[%s8 + $0x48] sm:$0xff]
        %v1274 = vld [vmem:[%s8 + $0x50] sm:$0xff]
        %v1275 = vld [vmem:[%s8 + $0x58] sm:$0xff]
        %v1276 = vld [vmem:[%s8 + $0x60] sm:$0xff]
        %v1277 = vld [vmem:[%s8 + $0x68] sm:$0xff]
        %v1278 = vld [vmem:[%s8 + $0x70] sm:$0xff]
        %v1279 = vld [vmem:[%s8 + $0x78] sm:$0xff]
        %v1280 = vld [vmem:[%s9] sm:$0x1]
        %v1282 = vperm.slane %v1280, 0
        %1284 = vmatpush.msra.mxu0 %v1279
        %1285 = vmatpush.msra.mxu0 %v1278
        %1286 = vmatpush.msra.mxu0 %v1277
        %1287 = vmatpush.msra.mxu0 %v1276
        %1288 = vmatpush.msra.mxu0 %v1275
        %1289 = vmatpush.msra.mxu0 %v1274
        %1290 = vmatpush.msra.mxu0 %v1273
        %1291 = vmatpush.msra.mxu0 %v1272
        %1292 = vmatpush.msra.mxu0 %v1271
        %1293 = vmatpush.msra.mxu0 %v1270
        %1294 = vmatpush.msra.mxu0 %v1269
        %1295 = vmatpush.msra.mxu0 %v1268
        %1296 = vmatpush.msra.mxu0 %v1267
        %1297 = vmatpush.msra.mxu0 %v1266
        %1298 = vmatpush.msra.mxu0 %v1265
        %1299 = vmatpush.msra.mxu0 %v1264
        %1300 = vmatmul.f32.gmra.mxu0 %v1263
        %v1301 = vpop.f32.mrf.mxu0
        %v1302 = vadd.f32 %v1282, %v1301
        %1303 = vdwg.mxu0
        %vm1304 = vcmask 15360
        %v1305 = vsel %vm1304, %v1302, -inf
        %1306 = vmax.xlane.f32.xlu0 %v1305
        %v1307 = vpop.xlane.xlu0 %1306
        %v1308 = vsub.f32 %v1302, %v1307
        %v1309 = vmul.f32 %v1308, 1.442695
        %v1310 = vpow.pop %v1309
        %v1311 = vsel %vm1304, %v1310, 0.0
        %1312 = vadd.xlane.f32.xlu0 %v1311
        %v1313 = vpop.xlane.xlu0 %1312
        %v1314 = vrcp.pop %v1313
        %v1315 = vmul.f32 %v1313, %v1314
        %v1316 = vsub.f32 1.0, %v1315
        %v1317 = vmul.f32 %v1314, %v1316
        %v1318 = vadd.f32 %v1314, %v1317
        %vm1319 = vweird.f32 %v1313
        %vm1320 = vweird.f32 %v1314
        %vm1321 = vmor %vm1319, %vm1320
        %v1322 = vsel %vm1321, %v1314, %v1318
        %v1323 = vand.u32 2147483647, %v1313
        %vm1324 = vcmp.eq.f32.partialorder %v1323, 8.507059e+37
        %v1325 = vand.u32 %v1313, 2147483648
        %v1326 = vor.u32 1.1754944e-38, %v1325
        %v1327 = vsel %vm1324, %v1326, %v1322
        %v1328 = vmul.f32 %v1310, %v1327
        %1329 = vst.msk [vmem:[%s398] sm:$0xff] %vm1304, %v1328
        %p1330 = scmp.lt.s32.totalorder %s22, 1
        %s1331 = scalar_select %p1330, %s22, 1
        %s1332 = smul.addr %s1331, 8
        %s1333 = scalar_lea.vmem %s10, %s1332
        // Predicated region
        $region65: #{tpu_custom_call.1} parent=59 // pred_check
          %p1334 = pneg %p260
        $region66: #{tpu_custom_call.1} parent=59 // pred_check_branch
          %1336 = sbr.rel (%p1334) target = $region68
        $region67: #{tpu_custom_call.1} parent=59 // pred_region
          _
        $region68: #{tpu_custom_call.1} parent=59 // pred_fallthru
          _
      $region60: #{tpu_custom_call.1} parent=5 // pred_fallthru
        _
      %p1337 = scmp.le.s32.totalorder 2, %s17
      // Predicated region
      $region69: #{tpu_custom_call.1} parent=5 // pred_check
        %p1338 = pneg %p1337
      $region70: #{tpu_custom_call.1} parent=5 // pred_check_branch
        %1340 = sbr.rel (%p1338) target = $region72
      $region71: #{tpu_custom_call.1} parent=5 // pred_region
        %s1341 = ssub.s32 %s17, 2
        // Predicated region
        $region73: #{tpu_custom_call.1} parent=71 // pred_check
          %p1342 = pneg %p266
        $region74: #{tpu_custom_call.1} parent=71 // pred_check_branch
          %1344 = sbr.rel (%p1342) target = $region76
        $region75: #{tpu_custom_call.1} parent=71 // pred_region
          %p1345 = scmp.lt.s32.totalorder %s23, 1
          %s1346 = scalar_select %p1345, %s23, 1
          %s1347 = smul.addr %s1346, 8
          %s1348 = scalar_lea.vmem %s10, %s1347
        $region76: #{tpu_custom_call.1} parent=71 // pred_fallthru
          _
      $region72: #{tpu_custom_call.1} parent=5 // pred_fallthru
        _
    $region6: #{tpu_custom_call.1} parent=1 // loop_footer
      %s21 = sadd.s32 1, %s17
    $region7: #{tpu_custom_call.1} parent=1 // loop_footer_branch
      %16 = sbr.rel target = $region3
    $region8: #{tpu_custom_call.1} parent=1 // loop_exit
      _
    %1349 = vsyncpa [#allocation5], 1
    %s1350 = scalar_lea.sflag [#allocation5], 1
    %1351 = vsyncpa %s1350, 1

</llo_original>
